<compile_context>
chip_gen: v6e
topology: v6e:2x2x1
jax: 0.10.0
libtpu: 0.0.40
codegen_flags: <defaults>
</compile_context>

<pallas_src>
import math

import jax
import jax.numpy as jnp
from jax.experimental import pallas as pl
from jax.experimental.pallas import tpu as pltpu

# ----------------------------------------------------------------------------
# Small synthetic config consistent with the module's forward
# ----------------------------------------------------------------------------
VOCAB = 64            # token_embedding vocab size
CTX_LEN = 8           # tokenized text length
D_MODEL = 32          # transformer width
NUM_HEADS = 4
HEAD_DIM = D_MODEL // NUM_HEADS
MLP_DIM = 4 * D_MODEL
NUM_LAYERS = 2
PROMPT_LEN = 4        # clip_model.prompt_length (== all_prompts_text[0].shape[1])
PROJ_DIM = 32         # text_projection output dim
BATCH = 2
DTYPE = jnp.float32   # activation dtype (clip_model.dtype; real CLIP uses fp16)
W_DTYPE = jnp.bfloat16  # MXU-side weight storage (f32 accumulation in-kernel)


def _layernorm(x, w, b, eps=1e-5):
    mu = jnp.mean(x, axis=-1, keepdims=True)
    var = jnp.mean(jnp.square(x - mu), axis=-1, keepdims=True)
    return (x - mu) * jax.lax.rsqrt(var + eps) * w + b


# ----------------------------------------------------------------------------
# Fused kernel: all residual attention blocks + ln_final + EOT gather + proj
# ----------------------------------------------------------------------------
def fused_text_transformer_kernel(
        x_ref, bias_ref, sel_ref, lnfw_ref, lnfb_ref, proj_ref,
        ln1w_ref, ln1b_ref, wqkv_ref, bqkv_ref, wo_ref, bo_ref,
        ln2w_ref, ln2b_ref, w1_ref, b1_ref, w2_ref, b2_ref,
        out_ref, acc_ref):
    layer = pl.program_id(0)

    # Load the embeddings once; activations stay resident in VMEM scratch.
    @pl.when(layer == 0)
    def _init():
        acc_ref[...] = x_ref[...].astype(jnp.float32)

    x = acc_ref[...]                                   # (BS, D) f32
    D = x.shape[-1]

    # ---- pre-LN multi-head causal self-attention ----
    ln1w = ln1w_ref[...][0, 0]
    ln1b = ln1b_ref[...][0, 0]
    xn = _layernorm(x, ln1w, ln1b)

    wqkv = wqkv_ref[...][0]                            # (D, 3D) bf16
    bqkv = bqkv_ref[...][0, 0]                         # (3D,)  f32
    qkv = jnp.dot(xn.astype(wqkv.dtype), wqkv,
                  preferred_element_type=jnp.float32) + bqkv

    scale = 1.0 / math.sqrt(HEAD_DIM)
    q = qkv[:, :D] * scale
    k = qkv[:, D:2 * D]
    v = qkv[:, 2 * D:]

    # Batch the heads into one 3-D dot_general (no per-head matmul loop, no k.T).
    q3 = jnp.stack([q[:, h * HEAD_DIM:(h + 1) * HEAD_DIM] for h in range(NUM_HEADS)], axis=0)
    k3 = jnp.stack([k[:, h * HEAD_DIM:(h + 1) * HEAD_DIM] for h in range(NUM_HEADS)], axis=0)
    v3 = jnp.stack([v[:, h * HEAD_DIM:(h + 1) * HEAD_DIM] for h in range(NUM_HEADS)], axis=0)

    s = jnp.einsum('hqd,hkd->hqk', q3.astype(jnp.bfloat16), k3.astype(jnp.bfloat16),
                   preferred_element_type=jnp.float32)          # (H, BS, BS)
    s = s + bias_ref[...]            # block-diagonal causal additive mask (hoisted)
    s = s - jnp.max(s, axis=-1, keepdims=True)
    p = jnp.exp(s)
    p = p * pl.reciprocal(jnp.sum(p, axis=-1, keepdims=True), approx=True)
    ctx3 = jnp.einsum('hqk,hkd->hqd', p.astype(jnp.bfloat16), v3.astype(jnp.bfloat16),
                      preferred_element_type=jnp.float32)        # (H, BS, HEAD_DIM)
    ctx = jnp.concatenate([ctx3[h] for h in range(NUM_HEADS)], axis=-1)   # (BS, D)

    wo = wo_ref[...][0]
    bo = bo_ref[...][0, 0]
    x = x + jnp.dot(ctx.astype(wo.dtype), wo, preferred_element_type=jnp.float32) + bo

    # ---- MLP with QuickGELU (x * sigmoid(1.702 x)) ----
    ln2w = ln2w_ref[...][0, 0]
    ln2b = ln2b_ref[...][0, 0]
    xn2 = _layernorm(x, ln2w, ln2b)
    w1 = w1_ref[...][0]
    b1 = b1_ref[...][0, 0]
    h1 = jnp.dot(xn2.astype(w1.dtype), w1, preferred_element_type=jnp.float32) + b1
    h1 = h1 * jax.nn.sigmoid(1.702 * h1)
    w2 = w2_ref[...][0]
    b2 = b2_ref[...][0, 0]
    x = x + jnp.dot(h1.astype(w2.dtype), w2, preferred_element_type=jnp.float32) + b2

    acc_ref[...] = x

    # ---- epilogue on the last layer: EOT-row gather, ln_final, text_projection ----
    @pl.when(layer == pl.num_programs(0) - 1)
    def _final():
        # sel is a (B, BS) one-hot selector of each sample's (prompt-stripped) EOT row,
        # so this matmul is an exact gather; ln(gather(x)) == gather(ln(x)) since LN
        # is per-row, matching the PyTorch ln-then-gather order.
        rows = jnp.dot(sel_ref[...], x, preferred_element_type=jnp.float32)   # (B, D)
        xn_f = _layernorm(rows, lnfw_ref[...][0], lnfb_ref[...][0])
        proj = proj_ref[...]
        out_ref[...] = jnp.dot(xn_f.astype(proj.dtype), proj,
                               preferred_element_type=jnp.float32).astype(out_ref.dtype)


def fused_text_transformer(x2d, attn_bias, sel, lnf_w, lnf_b, proj, stacked):
    BS, D = x2d.shape
    B = sel.shape[0]
    L = stacked['w_qkv'].shape[0]
    M = stacked['w_fc1'].shape[2]
    P = proj.shape[1]

    const2 = lambda l: (0, 0)
    per_layer = lambda l: (l, 0, 0)

    in_specs = [
        pl.BlockSpec((BS, D), const2),          # x (embeddings + pos, flattened)
        pl.BlockSpec((BS, BS), const2),         # block-diagonal causal additive mask
        pl.BlockSpec((B, BS), const2),          # EOT one-hot selector
        pl.BlockSpec((1, D), const2),           # ln_final w
        pl.BlockSpec((1, D), const2),           # ln_final b
        pl.BlockSpec((D, P), const2),           # text_projection
        pl.BlockSpec((1, 1, D), per_layer),     # ln1_w
        pl.BlockSpec((1, 1, D), per_layer),     # ln1_b
        pl.BlockSpec((1, D, 3 * D), per_layer),  # w_qkv
        pl.BlockSpec((1, 1, 3 * D), per_layer),  # b_qkv
        pl.BlockSpec((1, D, D), per_layer),     # w_o
        pl.BlockSpec((1, 1, D), per_layer),     # b_o
        pl.BlockSpec((1, 1, D), per_layer),     # ln2_w
        pl.BlockSpec((1, 1, D), per_layer),     # ln2_b
        pl.BlockSpec((1, D, M), per_layer),     # w_fc1
        pl.BlockSpec((1, 1, M), per_layer),     # b_fc1
        pl.BlockSpec((1, M, D), per_layer),     # w_fc2
        pl.BlockSpec((1, 1, D), per_layer),     # b_fc2
    ]

    return pl.pallas_call(
        fused_text_transformer_kernel,
        out_shape=jax.ShapeDtypeStruct((B, P), DTYPE),
        grid_spec=pltpu.PrefetchScalarGridSpec(
            num_scalar_prefetch=0,
            grid=(L,),
            in_specs=in_specs,
            out_specs=pl.BlockSpec((B, P), const2),
            scratch_shapes=[pltpu.VMEM((BS, D), jnp.float32)],
        ),
        compiler_params=pltpu.CompilerParams(dimension_semantics=("arbitrary",)),
    )(x2d, attn_bias, sel, lnf_w, lnf_b, proj,
      stacked['ln1_w'], stacked['ln1_b'], stacked['w_qkv'], stacked['b_qkv'],
      stacked['w_o'], stacked['b_o'], stacked['ln2_w'], stacked['ln2_b'],
      stacked['w_fc1'], stacked['b_fc1'], stacked['w_fc2'], stacked['b_fc2'])


# ----------------------------------------------------------------------------
# Parameter init (deterministic, synthetic; weights pre-stacked per layer)
# ----------------------------------------------------------------------------
def init_params(key):
    keys = jax.random.split(key, 4 + NUM_LAYERS * 4)
    s = 0.02

    def lk(l):
        return keys[4 + l * 4: 4 + (l + 1) * 4]

    stacked = {
        'ln1_w': jnp.ones((NUM_LAYERS, 1, D_MODEL), DTYPE),
        'ln1_b': jnp.zeros((NUM_LAYERS, 1, D_MODEL), DTYPE),
        'w_qkv': jnp.stack([s * jax.random.normal(lk(l)[0], (D_MODEL, 3 * D_MODEL), DTYPE)
                            for l in range(NUM_LAYERS)]).astype(W_DTYPE),
        'b_qkv': jnp.zeros((NUM_LAYERS, 1, 3 * D_MODEL), DTYPE),
        'w_o': jnp.stack([s * jax.random.normal(lk(l)[1], (D_MODEL, D_MODEL), DTYPE)
                          for l in range(NUM_LAYERS)]).astype(W_DTYPE),
        'b_o': jnp.zeros((NUM_LAYERS, 1, D_MODEL), DTYPE),
        'ln2_w': jnp.ones((NUM_LAYERS, 1, D_MODEL), DTYPE),
        'ln2_b': jnp.zeros((NUM_LAYERS, 1, D_MODEL), DTYPE),
        'w_fc1': jnp.stack([s * jax.random.normal(lk(l)[2], (D_MODEL, MLP_DIM), DTYPE)
                            for l in range(NUM_LAYERS)]).astype(W_DTYPE),
        'b_fc1': jnp.zeros((NUM_LAYERS, 1, MLP_DIM), DTYPE),
        'w_fc2': jnp.stack([s * jax.random.normal(lk(l)[3], (MLP_DIM, D_MODEL), DTYPE)
                            for l in range(NUM_LAYERS)]).astype(W_DTYPE),
        'b_fc2': jnp.zeros((NUM_LAYERS, 1, D_MODEL), DTYPE),
    }
    return {
        'token_embedding': s * jax.random.normal(keys[0], (VOCAB, D_MODEL), DTYPE),
        'positional_embedding': s * jax.random.normal(keys[1], (CTX_LEN, D_MODEL), DTYPE),
        'ln_final_w': jnp.ones((D_MODEL,), DTYPE),
        'ln_final_b': jnp.zeros((D_MODEL,), DTYPE),
        'text_projection': (s * jax.random.normal(keys[2], (D_MODEL, PROJ_DIM), DTYPE)).astype(W_DTYPE),
        'stacked': stacked,
    }


# ----------------------------------------------------------------------------
# Full forward (mirrors the PyTorch TextEncoder.forward)
# ----------------------------------------------------------------------------
def text_encoder_forward(tokenized_texts, all_prompts_text, missing_type, params):
    B, L_ctx = tokenized_texts.shape
    D = params['token_embedding'].shape[1]

    # token embedding + positional embedding (plain JAX; XLA fuses into the gather)
    x = jnp.take(params['token_embedding'], tokenized_texts, axis=0).astype(DTYPE)
    x = x + params['positional_embedding'][None, :, :].astype(DTYPE)

    # prepend layer-0 missing-aware text prompts (the `combined` input to the transformer)
    if len(all_prompts_text) > 0 and all_prompts_text[0] is not None:
        prompts = all_prompts_text[0].astype(DTYPE)                  # (B, prompt_len, D)
        actual_prompt_length = prompts.shape[1]
        x = jnp.concatenate([prompts, x], axis=1)                    # (B, P + L, D)
    else:
        actual_prompt_length = 0   # TODO(synk): transformer-internal prompt insertion not modeled
    S = actual_prompt_length + L_ctx

    # flatten the batch into rows: whole batch in one kernel block, packed sublanes
    x2d = x.reshape(B * S, D)

    # block-diagonal causal additive mask over [prompts ; tokens], hoisted out of the kernel loop
    idx = jnp.arange(B * S)
    b_id = idx // S
    pos = idx % S
    allowed = (b_id[:, None] == b_id[None, :]) & (pos[None, :] <= pos[:, None])
    attn_bias = jnp.where(allowed, 0.0, -1e9).astype(jnp.float32)    # (B*S, B*S)

    # EOT-row one-hot selector (after stripping the prompt tokens), in flattened row space
    eot = jnp.argmax(tokenized_texts, axis=-1)                       # (B,)
    rows_idx = jnp.arange(B) * S + actual_prompt_length + eot
    sel = jax.nn.one_hot(rows_idx, B * S, dtype=jnp.float32)         # (B, B*S)

    # `missing_type` would select prompt variants inside clip_model.transformer; unused here.
    out = fused_text_transformer(
        x2d, attn_bias, sel,
        params['ln_final_w'].reshape(1, D),
        params['ln_final_b'].reshape(1, D),
        params['text_projection'],
        params['stacked'])
    return out                                                       # (B, PROJ_DIM)


if __name__ == "__main__":
    key = jax.random.PRNGKey(0)
    k_param, k_tok, k_prompt = jax.random.split(key, 3)

    params = init_params(k_param)

    # tokenized texts: random tokens with an explicit EOT (highest id) per sequence
    tokens = jax.random.randint(k_tok, (BATCH, CTX_LEN), 1, 40, dtype=jnp.int32)
    eot_pos = jnp.array([CTX_LEN - 3, CTX_LEN - 1], dtype=jnp.int32)
    tokens = tokens.at[jnp.arange(BATCH), eot_pos].set(VOCAB - 1)

    # missing-aware text prompts for layer 0: (B, prompt_len, D)
    prompt0 = 0.02 * jax.random.normal(k_prompt, (BATCH, PROMPT_LEN, D_MODEL), DTYPE)
    all_prompts_text = [prompt0]
    missing_type = jnp.array([0, 1], dtype=jnp.int32)   # unused by the synthetic transformer

    out = text_encoder_forward(tokens, all_prompts_text, missing_type, params)
    out = jax.block_until_ready(out)
    assert out.shape == (BATCH, PROJ_DIM)
    print("KERNEL_OK")
</pallas_src>

<mosaic_0001>
module attributes {stable_mosaic.version = 11 : i64} {
  func.func @fused_text_transformer_kernel(%arg0: i32, %arg1: memref<24x32xf32, #tpu.memory_space<vmem>>, %arg2: memref<24x24xf32, #tpu.memory_space<vmem>>, %arg3: memref<2x24xf32, #tpu.memory_space<vmem>>, %arg4: memref<1x32xf32, #tpu.memory_space<vmem>>, %arg5: memref<1x32xf32, #tpu.memory_space<vmem>>, %arg6: memref<32x32xbf16, #tpu.memory_space<vmem>>, %arg7: memref<1x1x32xf32, #tpu.memory_space<vmem>>, %arg8: memref<1x1x32xf32, #tpu.memory_space<vmem>>, %arg9: memref<1x32x96xbf16, #tpu.memory_space<vmem>>, %arg10: memref<1x1x96xf32, #tpu.memory_space<vmem>>, %arg11: memref<1x32x32xbf16, #tpu.memory_space<vmem>>, %arg12: memref<1x1x32xf32, #tpu.memory_space<vmem>>, %arg13: memref<1x1x32xf32, #tpu.memory_space<vmem>>, %arg14: memref<1x1x32xf32, #tpu.memory_space<vmem>>, %arg15: memref<1x32x128xbf16, #tpu.memory_space<vmem>>, %arg16: memref<1x1x128xf32, #tpu.memory_space<vmem>>, %arg17: memref<1x128x32xbf16, #tpu.memory_space<vmem>>, %arg18: memref<1x1x32xf32, #tpu.memory_space<vmem>>, %arg19: memref<2x32xf32, #tpu.memory_space<vmem>>, %arg20: memref<24x32xf32, #tpu.memory_space<vmem>>) attributes {dimension_semantics = [#tpu.dimension_semantics<arbitrary>], iteration_bounds = array<i64: 2>, scalar_prefetch = 0 : i64, scratch_operands = 1 : i64, tpu.core_type = #tpu.core_type<tc>, window_params = [{pipeline_mode = #tpu.pipeline_mode<synchronous>, transform_indices = @transform_0, window_bounds = array<i64: 24, 32>}, {pipeline_mode = #tpu.pipeline_mode<synchronous>, transform_indices = @transform_1, window_bounds = array<i64: 24, 24>}, {pipeline_mode = #tpu.pipeline_mode<synchronous>, transform_indices = @transform_2, window_bounds = array<i64: 2, 24>}, {pipeline_mode = #tpu.pipeline_mode<synchronous>, transform_indices = @transform_3, window_bounds = array<i64: 1, 32>}, {pipeline_mode = #tpu.pipeline_mode<synchronous>, transform_indices = @transform_4, window_bounds = array<i64: 1, 32>}, {pipeline_mode = #tpu.pipeline_mode<synchronous>, transform_indices = @transform_5, window_bounds = array<i64: 32, 32>}, {transform_indices = @transform_6, window_bounds = array<i64: 1, 1, 32>}, {transform_indices = @transform_7, window_bounds = array<i64: 1, 1, 32>}, {transform_indices = @transform_8, window_bounds = array<i64: 1, 32, 96>}, {transform_indices = @transform_9, window_bounds = array<i64: 1, 1, 96>}, {transform_indices = @transform_10, window_bounds = array<i64: 1, 32, 32>}, {transform_indices = @transform_11, window_bounds = array<i64: 1, 1, 32>}, {transform_indices = @transform_12, window_bounds = array<i64: 1, 1, 32>}, {transform_indices = @transform_13, window_bounds = array<i64: 1, 1, 32>}, {transform_indices = @transform_14, window_bounds = array<i64: 1, 32, 128>}, {transform_indices = @transform_15, window_bounds = array<i64: 1, 1, 128>}, {transform_indices = @transform_16, window_bounds = array<i64: 1, 128, 32>}, {transform_indices = @transform_17, window_bounds = array<i64: 1, 1, 32>}, {pipeline_mode = #tpu.pipeline_mode<synchronous>, transform_indices = @transform_18, window_bounds = array<i64: 2, 32>}]} {
    %c0_i32 = arith.constant 0 : i32
    %0 = arith.cmpi eq, %arg0, %c0_i32 : i32
    %1 = arith.extui %0 : i1 to i32
    %c0_i32_0 = arith.constant 0 : i32
    %2 = arith.cmpi ne, %1, %c0_i32_0 : i32
    scf.if %2 {
      %c0_63 = arith.constant 0 : index
      %c0_64 = arith.constant 0 : index
      %171 = vector.load %arg1[%c0_63, %c0_64] : memref<24x32xf32, #tpu.memory_space<vmem>>, vector<24x32xf32>
      %c0_65 = arith.constant 0 : index
      %c0_66 = arith.constant 0 : index
      %172 = vector.load %arg20[%c0_65, %c0_66] : memref<24x32xf32, #tpu.memory_space<vmem>>, vector<24x32xf32>
      tpu.vector_store %arg20[%c0_65, %c0_66], %171 {strides = array<i32>} : memref<24x32xf32, #tpu.memory_space<vmem>>, vector<24x32xf32>,
    } else {
    }
    %c0 = arith.constant 0 : index
    %c0_1 = arith.constant 0 : index
    %3 = vector.load %arg20[%c0, %c0_1] : memref<24x32xf32, #tpu.memory_space<vmem>>, vector<24x32xf32>
    %c0_2 = arith.constant 0 : index
    %c0_3 = arith.constant 0 : index
    %c0_4 = arith.constant 0 : index
    %4 = vector.load %arg7[%c0_2, %c0_3, %c0_4] : memref<1x1x32xf32, #tpu.memory_space<vmem>>, vector<1x1x32xf32>
    %5 = vector.shape_cast %4 : vector<1x1x32xf32> to vector<32xf32>
    %c0_5 = arith.constant 0 : index
    %c0_6 = arith.constant 0 : index
    %c0_7 = arith.constant 0 : index
    %6 = vector.load %arg8[%c0_5, %c0_6, %c0_7] : memref<1x1x32xf32, #tpu.memory_space<vmem>>, vector<1x1x32xf32>
    %7 = vector.shape_cast %6 : vector<1x1x32xf32> to vector<32xf32>
    %cst = arith.constant dense<0.000000e+00> : vector<24xf32>
    %8 = vector.multi_reduction <add>, %3, %cst [1] : vector<24x32xf32> to vector<24xf32>
    %9 = vector.shape_cast %8 : vector<24xf32> to vector<24x1xf32>
    %cst_8 = arith.constant 3.200000e+01 : f32
    %10 = vector.broadcast %cst_8 : f32 to vector<24x1xf32>
    %11 = arith.divf %9, %10 : vector<24x1xf32>
    %12 = vector.broadcast %11 : vector<24x1xf32> to vector<24x32xf32>
    %13 = arith.subf %3, %12 : vector<24x32xf32>
    %14 = arith.mulf %13, %13 : vector<24x32xf32>
    %cst_9 = arith.constant dense<0.000000e+00> : vector<24xf32>
    %15 = vector.multi_reduction <add>, %14, %cst_9 [1] : vector<24x32xf32> to vector<24xf32>
    %16 = vector.shape_cast %15 : vector<24xf32> to vector<24x1xf32>
    %cst_10 = arith.constant 3.200000e+01 : f32
    %17 = vector.broadcast %cst_10 : f32 to vector<24x1xf32>
    %18 = arith.divf %16, %17 : vector<24x1xf32>
    %19 = vector.broadcast %11 : vector<24x1xf32> to vector<24x32xf32>
    %20 = arith.subf %3, %19 : vector<24x32xf32>
    %cst_11 = arith.constant 9.99999974E-6 : f32
    %21 = vector.broadcast %cst_11 : f32 to vector<24x1xf32>
    %22 = arith.addf %18, %21 : vector<24x1xf32>
    %23 = math.rsqrt %22 : vector<24x1xf32>
    %24 = vector.broadcast %23 : vector<24x1xf32> to vector<24x32xf32>
    %25 = arith.mulf %20, %24 : vector<24x32xf32>
    %26 = vector.shape_cast %5 : vector<32xf32> to vector<1x32xf32>
    %27 = vector.broadcast %26 : vector<1x32xf32> to vector<24x32xf32>
    %28 = arith.mulf %25, %27 : vector<24x32xf32>
    %29 = vector.shape_cast %7 : vector<32xf32> to vector<1x32xf32>
    %30 = vector.broadcast %29 : vector<1x32xf32> to vector<24x32xf32>
    %31 = arith.addf %28, %30 : vector<24x32xf32>
    %c0_12 = arith.constant 0 : index
    %c0_13 = arith.constant 0 : index
    %c0_14 = arith.constant 0 : index
    %32 = vector.load %arg9[%c0_12, %c0_13, %c0_14] : memref<1x32x96xbf16, #tpu.memory_space<vmem>>, vector<1x32x96xbf16>
    %33 = vector.shape_cast %32 : vector<1x32x96xbf16> to vector<32x96xbf16>
    %c0_15 = arith.constant 0 : index
    %c0_16 = arith.constant 0 : index
    %c0_17 = arith.constant 0 : index
    %34 = vector.load %arg10[%c0_15, %c0_16, %c0_17] : memref<1x1x96xf32, #tpu.memory_space<vmem>>, vector<1x1x96xf32>
    %35 = vector.shape_cast %34 : vector<1x1x96xf32> to vector<96xf32>
    %36 = arith.truncf %31 : vector<24x32xf32> to vector<24x32xbf16>
    %cst_18 = arith.constant dense<0.000000e+00> : vector<24x96xf32>
    %37 = tpu.matmul %36, %33, %cst_18 {dimension_numbers = #tpu.dot_dimension_numbers<[1], [0], [0], [1], [0, 0, 1, 1], [], []>} : vector<24x32xbf16>, vector<32x96xbf16>, vector<24x96xf32> -> vector<24x96xf32>
    %38 = vector.shape_cast %35 : vector<96xf32> to vector<1x96xf32>
    %39 = vector.broadcast %38 : vector<1x96xf32> to vector<24x96xf32>
    %40 = arith.addf %37, %39 : vector<24x96xf32>
    %41 = vector.extract_strided_slice %40 {offsets = [0, 0], sizes = [24, 32], strides = [1, 1]} : vector<24x96xf32> to vector<24x32xf32>
    %cst_19 = arith.constant 0.353553385 : f32
    %42 = vector.broadcast %cst_19 : f32 to vector<24x32xf32>
    %43 = arith.mulf %41, %42 : vector<24x32xf32>
    %44 = vector.extract_strided_slice %40 {offsets = [0, 32], sizes = [24, 32], strides = [1, 1]} : vector<24x96xf32> to vector<24x32xf32>
    %45 = vector.extract_strided_slice %40 {offsets = [0, 64], sizes = [24, 32], strides = [1, 1]} : vector<24x96xf32> to vector<24x32xf32>
    %46 = vector.extract_strided_slice %43 {offsets = [0, 0], sizes = [24, 8], strides = [1, 1]} : vector<24x32xf32> to vector<24x8xf32>
    %47 = vector.extract_strided_slice %43 {offsets = [0, 8], sizes = [24, 8], strides = [1, 1]} : vector<24x32xf32> to vector<24x8xf32>
    %48 = vector.extract_strided_slice %43 {offsets = [0, 16], sizes = [24, 8], strides = [1, 1]} : vector<24x32xf32> to vector<24x8xf32>
    %49 = vector.extract_strided_slice %43 {offsets = [0, 24], sizes = [24, 8], strides = [1, 1]} : vector<24x32xf32> to vector<24x8xf32>
    %50 = vector.shape_cast %46 : vector<24x8xf32> to vector<1x24x8xf32>
    %51 = vector.shape_cast %47 : vector<24x8xf32> to vector<1x24x8xf32>
    %52 = vector.shape_cast %48 : vector<24x8xf32> to vector<1x24x8xf32>
    %53 = vector.shape_cast %49 : vector<24x8xf32> to vector<1x24x8xf32>
    %54 = tpu.concatenate %50, %51, %52, %53 in 0 : vector<1x24x8xf32>, vector<1x24x8xf32>, vector<1x24x8xf32>, vector<1x24x8xf32> -> vector<4x24x8xf32>
    %55 = vector.extract_strided_slice %44 {offsets = [0, 0], sizes = [24, 8], strides = [1, 1]} : vector<24x32xf32> to vector<24x8xf32>
    %56 = vector.extract_strided_slice %44 {offsets = [0, 8], sizes = [24, 8], strides = [1, 1]} : vector<24x32xf32> to vector<24x8xf32>
    %57 = vector.extract_strided_slice %44 {offsets = [0, 16], sizes = [24, 8], strides = [1, 1]} : vector<24x32xf32> to vector<24x8xf32>
    %58 = vector.extract_strided_slice %44 {offsets = [0, 24], sizes = [24, 8], strides = [1, 1]} : vector<24x32xf32> to vector<24x8xf32>
    %59 = vector.shape_cast %55 : vector<24x8xf32> to vector<1x24x8xf32>
    %60 = vector.shape_cast %56 : vector<24x8xf32> to vector<1x24x8xf32>
    %61 = vector.shape_cast %57 : vector<24x8xf32> to vector<1x24x8xf32>
    %62 = vector.shape_cast %58 : vector<24x8xf32> to vector<1x24x8xf32>
    %63 = tpu.concatenate %59, %60, %61, %62 in 0 : vector<1x24x8xf32>, vector<1x24x8xf32>, vector<1x24x8xf32>, vector<1x24x8xf32> -> vector<4x24x8xf32>
    %64 = vector.extract_strided_slice %45 {offsets = [0, 0], sizes = [24, 8], strides = [1, 1]} : vector<24x32xf32> to vector<24x8xf32>
    %65 = vector.extract_strided_slice %45 {offsets = [0, 8], sizes = [24, 8], strides = [1, 1]} : vector<24x32xf32> to vector<24x8xf32>
    %66 = vector.extract_strided_slice %45 {offsets = [0, 16], sizes = [24, 8], strides = [1, 1]} : vector<24x32xf32> to vector<24x8xf32>
    %67 = vector.extract_strided_slice %45 {offsets = [0, 24], sizes = [24, 8], strides = [1, 1]} : vector<24x32xf32> to vector<24x8xf32>
    %68 = vector.shape_cast %64 : vector<24x8xf32> to vector<1x24x8xf32>
    %69 = vector.shape_cast %65 : vector<24x8xf32> to vector<1x24x8xf32>
    %70 = vector.shape_cast %66 : vector<24x8xf32> to vector<1x24x8xf32>
    %71 = vector.shape_cast %67 : vector<24x8xf32> to vector<1x24x8xf32>
    %72 = tpu.concatenate %68, %69, %70, %71 in 0 : vector<1x24x8xf32>, vector<1x24x8xf32>, vector<1x24x8xf32>, vector<1x24x8xf32> -> vector<4x24x8xf32>
    %73 = arith.truncf %54 : vector<4x24x8xf32> to vector<4x24x8xbf16>
    %74 = arith.truncf %63 : vector<4x24x8xf32> to vector<4x24x8xbf16>
    "tpu.trace_start"() <{level = 10 : i32, message = "hqd,hkd->hqk"}> : () -> ()
    %cst_20 = arith.constant dense<0.000000e+00> : vector<4x24x24xf32>
    %75 = tpu.matmul %73, %74, %cst_20 {dimension_numbers = #tpu.dot_dimension_numbers<[2], [2], [1], [1], [0, 0, 0, 1, 1, 1], [0], [0]>} : vector<4x24x8xbf16>, vector<4x24x8xbf16>, vector<4x24x24xf32> -> vector<4x24x24xf32>
    "tpu.trace_stop"() : () -> ()
    %c0_21 = arith.constant 0 : index
    %c0_22 = arith.constant 0 : index
    %76 = vector.load %arg2[%c0_21, %c0_22] : memref<24x24xf32, #tpu.memory_space<vmem>>, vector<24x24xf32>
    %77 = vector.shape_cast %76 : vector<24x24xf32> to vector<1x24x24xf32>
    %78 = vector.broadcast %77 : vector<1x24x24xf32> to vector<4x24x24xf32>
    %79 = arith.addf %75, %78 : vector<4x24x24xf32>
    %cst_23 = arith.constant dense<0xFF800000> : vector<4x24xf32>
    %80 = vector.multi_reduction <maximumf>, %79, %cst_23 [2] : vector<4x24x24xf32> to vector<4x24xf32>
    %81 = vector.shape_cast %80 : vector<4x24xf32> to vector<4x24x1xf32>
    %82 = vector.broadcast %81 : vector<4x24x1xf32> to vector<4x24x24xf32>
    %83 = arith.subf %79, %82 : vector<4x24x24xf32>
    %84 = math.exp %83 : vector<4x24x24xf32>
    %cst_24 = arith.constant dense<0.000000e+00> : vector<4x24xf32>
    %85 = vector.multi_reduction <add>, %84, %cst_24 [2] : vector<4x24x24xf32> to vector<4x24xf32>
    %86 = vector.shape_cast %85 : vector<4x24xf32> to vector<4x24x1xf32>
    %87 = tpu.reciprocal %86 {approx = true} : vector<4x24x1xf32> -> vector<4x24x1xf32>
    %88 = vector.broadcast %87 : vector<4x24x1xf32> to vector<4x24x24xf32>
    %89 = arith.mulf %84, %88 : vector<4x24x24xf32>
    %90 = arith.truncf %89 : vector<4x24x24xf32> to vector<4x24x24xbf16>
    %91 = arith.truncf %72 : vector<4x24x8xf32> to vector<4x24x8xbf16>
    "tpu.trace_start"() <{level = 10 : i32, message = "hqk,hkd->hqd"}> : () -> ()
    %cst_25 = arith.constant dense<0.000000e+00> : vector<4x24x8xf32>
    %92 = tpu.matmul %90, %91, %cst_25 {dimension_numbers = #tpu.dot_dimension_numbers<[2], [1], [1], [2], [0, 0, 0, 1, 1, 2], [0], [0]>} : vector<4x24x24xbf16>, vector<4x24x8xbf16>, vector<4x24x8xf32> -> vector<4x24x8xf32>
    "tpu.trace_stop"() : () -> ()
    %93 = vector.extract_strided_slice %92 {offsets = [0, 0, 0], sizes = [1, 24, 8], strides = [1, 1, 1]} : vector<4x24x8xf32> to vector<1x24x8xf32>
    %94 = vector.shape_cast %93 : vector<1x24x8xf32> to vector<24x8xf32>
    %95 = vector.extract_strided_slice %92 {offsets = [1, 0, 0], sizes = [1, 24, 8], strides = [1, 1, 1]} : vector<4x24x8xf32> to vector<1x24x8xf32>
    %96 = vector.shape_cast %95 : vector<1x24x8xf32> to vector<24x8xf32>
    %97 = vector.extract_strided_slice %92 {offsets = [2, 0, 0], sizes = [1, 24, 8], strides = [1, 1, 1]} : vector<4x24x8xf32> to vector<1x24x8xf32>
    %98 = vector.shape_cast %97 : vector<1x24x8xf32> to vector<24x8xf32>
    %99 = vector.extract_strided_slice %92 {offsets = [3, 0, 0], sizes = [1, 24, 8], strides = [1, 1, 1]} : vector<4x24x8xf32> to vector<1x24x8xf32>
    %100 = vector.shape_cast %99 : vector<1x24x8xf32> to vector<24x8xf32>
    %101 = tpu.concatenate %94, %96, %98, %100 in 1 : vector<24x8xf32>, vector<24x8xf32>, vector<24x8xf32>, vector<24x8xf32> -> vector<24x32xf32>
    %c0_26 = arith.constant 0 : index
    %c0_27 = arith.constant 0 : index
    %c0_28 = arith.constant 0 : index
    %102 = vector.load %arg11[%c0_26, %c0_27, %c0_28] : memref<1x32x32xbf16, #tpu.memory_space<vmem>>, vector<1x32x32xbf16>
    %103 = vector.shape_cast %102 : vector<1x32x32xbf16> to vector<32x32xbf16>
    %c0_29 = arith.constant 0 : index
    %c0_30 = arith.constant 0 : index
    %c0_31 = arith.constant 0 : index
    %104 = vector.load %arg12[%c0_29, %c0_30, %c0_31] : memref<1x1x32xf32, #tpu.memory_space<vmem>>, vector<1x1x32xf32>
    %105 = vector.shape_cast %104 : vector<1x1x32xf32> to vector<32xf32>
    %106 = arith.truncf %101 : vector<24x32xf32> to vector<24x32xbf16>
    %cst_32 = arith.constant dense<0.000000e+00> : vector<24x32xf32>
    %107 = tpu.matmul %106, %103, %cst_32 {dimension_numbers = #tpu.dot_dimension_numbers<[1], [0], [0], [1], [0, 0, 1, 1], [], []>} : vector<24x32xbf16>, vector<32x32xbf16>, vector<24x32xf32> -> vector<24x32xf32>
    %108 = arith.addf %3, %107 : vector<24x32xf32>
    %109 = vector.shape_cast %105 : vector<32xf32> to vector<1x32xf32>
    %110 = vector.broadcast %109 : vector<1x32xf32> to vector<24x32xf32>
    %111 = arith.addf %108, %110 : vector<24x32xf32>
    %c0_33 = arith.constant 0 : index
    %c0_34 = arith.constant 0 : index
    %c0_35 = arith.constant 0 : index
    %112 = vector.load %arg13[%c0_33, %c0_34, %c0_35] : memref<1x1x32xf32, #tpu.memory_space<vmem>>, vector<1x1x32xf32>
    %113 = vector.shape_cast %112 : vector<1x1x32xf32> to vector<32xf32>
    %c0_36 = arith.constant 0 : index
    %c0_37 = arith.constant 0 : index
    %c0_38 = arith.constant 0 : index
    %114 = vector.load %arg14[%c0_36, %c0_37, %c0_38] : memref<1x1x32xf32, #tpu.memory_space<vmem>>, vector<1x1x32xf32>
    %115 = vector.shape_cast %114 : vector<1x1x32xf32> to vector<32xf32>
    %cst_39 = arith.constant dense<0.000000e+00> : vector<24xf32>
    %116 = vector.multi_reduction <add>, %111, %cst_39 [1] : vector<24x32xf32> to vector<24xf32>
    %117 = vector.shape_cast %116 : vector<24xf32> to vector<24x1xf32>
    %cst_40 = arith.constant 3.200000e+01 : f32
    %118 = vector.broadcast %cst_40 : f32 to vector<24x1xf32>
    %119 = arith.divf %117, %118 : vector<24x1xf32>
    %120 = vector.broadcast %119 : vector<24x1xf32> to vector<24x32xf32>
    %121 = arith.subf %111, %120 : vector<24x32xf32>
    %122 = arith.mulf %121, %121 : vector<24x32xf32>
    %cst_41 = arith.constant dense<0.000000e+00> : vector<24xf32>
    %123 = vector.multi_reduction <add>, %122, %cst_41 [1] : vector<24x32xf32> to vector<24xf32>
    %124 = vector.shape_cast %123 : vector<24xf32> to vector<24x1xf32>
    %cst_42 = arith.constant 3.200000e+01 : f32
    %125 = vector.broadcast %cst_42 : f32 to vector<24x1xf32>
    %126 = arith.divf %124, %125 : vector<24x1xf32>
    %127 = vector.broadcast %119 : vector<24x1xf32> to vector<24x32xf32>
    %128 = arith.subf %111, %127 : vector<24x32xf32>
    %cst_43 = arith.constant 9.99999974E-6 : f32
    %129 = vector.broadcast %cst_43 : f32 to vector<24x1xf32>
    %130 = arith.addf %126, %129 : vector<24x1xf32>
    %131 = math.rsqrt %130 : vector<24x1xf32>
    %132 = vector.broadcast %131 : vector<24x1xf32> to vector<24x32xf32>
    %133 = arith.mulf %128, %132 : vector<24x32xf32>
    %134 = vector.shape_cast %113 : vector<32xf32> to vector<1x32xf32>
    %135 = vector.broadcast %134 : vector<1x32xf32> to vector<24x32xf32>
    %136 = arith.mulf %133, %135 : vector<24x32xf32>
    %137 = vector.shape_cast %115 : vector<32xf32> to vector<1x32xf32>
    %138 = vector.broadcast %137 : vector<1x32xf32> to vector<24x32xf32>
    %139 = arith.addf %136, %138 : vector<24x32xf32>
    %c0_44 = arith.constant 0 : index
    %c0_45 = arith.constant 0 : index
    %c0_46 = arith.constant 0 : index
    %140 = vector.load %arg15[%c0_44, %c0_45, %c0_46] : memref<1x32x128xbf16, #tpu.memory_space<vmem>>, vector<1x32x128xbf16>
    %141 = vector.shape_cast %140 : vector<1x32x128xbf16> to vector<32x128xbf16>
    %c0_47 = arith.constant 0 : index
    %c0_48 = arith.constant 0 : index
    %c0_49 = arith.constant 0 : index
    %142 = vector.load %arg16[%c0_47, %c0_48, %c0_49] : memref<1x1x128xf32, #tpu.memory_space<vmem>>, vector<1x1x128xf32>
    %143 = vector.shape_cast %142 : vector<1x1x128xf32> to vector<128xf32>
    %144 = arith.truncf %139 : vector<24x32xf32> to vector<24x32xbf16>
    %cst_50 = arith.constant dense<0.000000e+00> : vector<24x128xf32>
    %145 = tpu.matmul %144, %141, %cst_50 {dimension_numbers = #tpu.dot_dimension_numbers<[1], [0], [0], [1], [0, 0, 1, 1], [], []>} : vector<24x32xbf16>, vector<32x128xbf16>, vector<24x128xf32> -> vector<24x128xf32>
    %146 = vector.shape_cast %143 : vector<128xf32> to vector<1x128xf32>
    %147 = vector.broadcast %146 : vector<1x128xf32> to vector<24x128xf32>
    %148 = arith.addf %145, %147 : vector<24x128xf32>
    %cst_51 = arith.constant 1.702000e+00 : f32
    %149 = vector.broadcast %cst_51 : f32 to vector<24x128xf32>
    %150 = arith.mulf %149, %148 : vector<24x128xf32>
    %151 = arith.negf %150 : vector<24x128xf32>
    %152 = math.exp %151 : vector<24x128xf32>
    %cst_52 = arith.constant 1.000000e+00 : f32
    %153 = vector.broadcast %cst_52 : f32 to vector<24x128xf32>
    %154 = arith.addf %153, %152 : vector<24x128xf32>
    %155 = arith.divf %153, %154 : vector<24x128xf32>
    %156 = arith.mulf %148, %155 : vector<24x128xf32>
    %c0_53 = arith.constant 0 : index
    %c0_54 = arith.constant 0 : index
    %c0_55 = arith.constant 0 : index
    %157 = vector.load %arg17[%c0_53, %c0_54, %c0_55] : memref<1x128x32xbf16, #tpu.memory_space<vmem>>, vector<1x128x32xbf16>
    %158 = vector.shape_cast %157 : vector<1x128x32xbf16> to vector<128x32xbf16>
    %c0_56 = arith.constant 0 : index
    %c0_57 = arith.constant 0 : index
    %c0_58 = arith.constant 0 : index
    %159 = vector.load %arg18[%c0_56, %c0_57, %c0_58] : memref<1x1x32xf32, #tpu.memory_space<vmem>>, vector<1x1x32xf32>
    %160 = vector.shape_cast %159 : vector<1x1x32xf32> to vector<32xf32>
    %161 = arith.truncf %156 : vector<24x128xf32> to vector<24x128xbf16>
    %cst_59 = arith.constant dense<0.000000e+00> : vector<24x32xf32>
    %162 = tpu.matmul %161, %158, %cst_59 {dimension_numbers = #tpu.dot_dimension_numbers<[1], [0], [0], [1], [0, 0, 1, 1], [], []>} : vector<24x128xbf16>, vector<128x32xbf16>, vector<24x32xf32> -> vector<24x32xf32>
    %163 = arith.addf %111, %162 : vector<24x32xf32>
    %164 = vector.shape_cast %160 : vector<32xf32> to vector<1x32xf32>
    %165 = vector.broadcast %164 : vector<1x32xf32> to vector<24x32xf32>
    %166 = arith.addf %163, %165 : vector<24x32xf32>
    %c0_60 = arith.constant 0 : index
    %c0_61 = arith.constant 0 : index
    %167 = vector.load %arg20[%c0_60, %c0_61] : memref<24x32xf32, #tpu.memory_space<vmem>>, vector<24x32xf32>
    tpu.vector_store %arg20[%c0_60, %c0_61], %166 {strides = array<i32>} : memref<24x32xf32, #tpu.memory_space<vmem>>, vector<24x32xf32>,
    %c1_i32 = arith.constant 1 : i32
    %168 = arith.cmpi eq, %arg0, %c1_i32 : i32
    %169 = arith.extui %168 : i1 to i32
    %c0_i32_62 = arith.constant 0 : i32
    %170 = arith.cmpi ne, %169, %c0_i32_62 : i32
    scf.if %170 {
      %c0_63 = arith.constant 0 : index
      %c0_64 = arith.constant 0 : index
      %171 = vector.load %arg3[%c0_63, %c0_64] : memref<2x24xf32, #tpu.memory_space<vmem>>, vector<2x24xf32>
      %cst_65 = arith.constant dense<0.000000e+00> : vector<2x32xf32>
      %172 = tpu.matmul %171, %166, %cst_65 {dimension_numbers = #tpu.dot_dimension_numbers<[1], [0], [0], [1], [0, 0, 1, 1], [], []>} : vector<2x24xf32>, vector<24x32xf32>, vector<2x32xf32> -> vector<2x32xf32>
      %c0_66 = arith.constant 0 : index
      %c0_67 = arith.constant 0 : index
      %173 = vector.load %arg4[%c0_66, %c0_67] : memref<1x32xf32, #tpu.memory_space<vmem>>, vector<1x32xf32>
      %174 = vector.shape_cast %173 : vector<1x32xf32> to vector<32xf32>
      %c0_68 = arith.constant 0 : index
      %c0_69 = arith.constant 0 : index
      %175 = vector.load %arg5[%c0_68, %c0_69] : memref<1x32xf32, #tpu.memory_space<vmem>>, vector<1x32xf32>
      %176 = vector.shape_cast %175 : vector<1x32xf32> to vector<32xf32>
      %cst_70 = arith.constant dense<0.000000e+00> : vector<2xf32>
      %177 = vector.multi_reduction <add>, %172, %cst_70 [1] : vector<2x32xf32> to vector<2xf32>
      %178 = vector.shape_cast %177 : vector<2xf32> to vector<2x1xf32>
      %cst_71 = arith.constant 3.200000e+01 : f32
      %179 = vector.broadcast %cst_71 : f32 to vector<2x1xf32>
      %180 = arith.divf %178, %179 : vector<2x1xf32>
      %181 = vector.broadcast %180 : vector<2x1xf32> to vector<2x32xf32>
      %182 = arith.subf %172, %181 : vector<2x32xf32>
      %183 = arith.mulf %182, %182 : vector<2x32xf32>
      %cst_72 = arith.constant dense<0.000000e+00> : vector<2xf32>
      %184 = vector.multi_reduction <add>, %183, %cst_72 [1] : vector<2x32xf32> to vector<2xf32>
      %185 = vector.shape_cast %184 : vector<2xf32> to vector<2x1xf32>
      %cst_73 = arith.constant 3.200000e+01 : f32
      %186 = vector.broadcast %cst_73 : f32 to vector<2x1xf32>
      %187 = arith.divf %185, %186 : vector<2x1xf32>
      %188 = vector.broadcast %180 : vector<2x1xf32> to vector<2x32xf32>
      %189 = arith.subf %172, %188 : vector<2x32xf32>
      %cst_74 = arith.constant 9.99999974E-6 : f32
      %190 = vector.broadcast %cst_74 : f32 to vector<2x1xf32>
      %191 = arith.addf %187, %190 : vector<2x1xf32>
      %192 = math.rsqrt %191 : vector<2x1xf32>
      %193 = vector.broadcast %192 : vector<2x1xf32> to vector<2x32xf32>
      %194 = arith.mulf %189, %193 : vector<2x32xf32>
      %195 = vector.shape_cast %174 : vector<32xf32> to vector<1x32xf32>
      %196 = vector.broadcast %195 : vector<1x32xf32> to vector<2x32xf32>
      %197 = arith.mulf %194, %196 : vector<2x32xf32>
      %198 = vector.shape_cast %176 : vector<32xf32> to vector<1x32xf32>
      %199 = vector.broadcast %198 : vector<1x32xf32> to vector<2x32xf32>
      %200 = arith.addf %197, %199 : vector<2x32xf32>
      %c0_75 = arith.constant 0 : index
      %c0_76 = arith.constant 0 : index
      %201 = vector.load %arg6[%c0_75, %c0_76] : memref<32x32xbf16, #tpu.memory_space<vmem>>, vector<32x32xbf16>
      %202 = arith.truncf %200 : vector<2x32xf32> to vector<2x32xbf16>
      %cst_77 = arith.constant dense<0.000000e+00> : vector<2x32xf32>
      %203 = tpu.matmul %202, %201, %cst_77 {dimension_numbers = #tpu.dot_dimension_numbers<[1], [0], [0], [1], [0, 0, 1, 1], [], []>} : vector<2x32xbf16>, vector<32x32xbf16>, vector<2x32xf32> -> vector<2x32xf32>
      %c0_78 = arith.constant 0 : index
      %c0_79 = arith.constant 0 : index
      %204 = vector.load %arg19[%c0_78, %c0_79] : memref<2x32xf32, #tpu.memory_space<vmem>>, vector<2x32xf32>
      tpu.vector_store %arg19[%c0_78, %c0_79], %203 {strides = array<i32>} : memref<2x32xf32, #tpu.memory_space<vmem>>, vector<2x32xf32>,
    } else {
    }
    return
  }
  func.func @transform_0(%arg0: i32) -> (i32, i32) {
    %c0_i32 = arith.constant 0 : i32
    %c0_i32_0 = arith.constant 0 : i32
    %c0_i32_1 = arith.constant 0 : i32
    return %c0_i32, %c0_i32_0 : i32, i32
  }
  func.func @transform_1(%arg0: i32) -> (i32, i32) {
    %c0_i32 = arith.constant 0 : i32
    %c0_i32_0 = arith.constant 0 : i32
    %c0_i32_1 = arith.constant 0 : i32
    return %c0_i32, %c0_i32_0 : i32, i32
  }
  func.func @transform_2(%arg0: i32) -> (i32, i32) {
    %c0_i32 = arith.constant 0 : i32
    %c0_i32_0 = arith.constant 0 : i32
    %c0_i32_1 = arith.constant 0 : i32
    return %c0_i32, %c0_i32_0 : i32, i32
  }
  func.func @transform_3(%arg0: i32) -> (i32, i32) {
    %c0_i32 = arith.constant 0 : i32
    %c0_i32_0 = arith.constant 0 : i32
    %c0_i32_1 = arith.constant 0 : i32
    return %c0_i32, %c0_i32_0 : i32, i32
  }
  func.func @transform_4(%arg0: i32) -> (i32, i32) {
    %c0_i32 = arith.constant 0 : i32
    %c0_i32_0 = arith.constant 0 : i32
    %c0_i32_1 = arith.constant 0 : i32
    return %c0_i32, %c0_i32_0 : i32, i32
  }
  func.func @transform_5(%arg0: i32) -> (i32, i32) {
    %c0_i32 = arith.constant 0 : i32
    %c0_i32_0 = arith.constant 0 : i32
    %c0_i32_1 = arith.constant 0 : i32
    return %c0_i32, %c0_i32_0 : i32, i32
  }
  func.func @transform_6(%arg0: i32) -> (i32, i32, i32) {
    %c0_i32 = arith.constant 0 : i32
    %c0_i32_0 = arith.constant 0 : i32
    %c0_i32_1 = arith.constant 0 : i32
    return %arg0, %c0_i32, %c0_i32_0 : i32, i32, i32
  }
  func.func @transform_7(%arg0: i32) -> (i32, i32, i32) {
    %c0_i32 = arith.constant 0 : i32
    %c0_i32_0 = arith.constant 0 : i32
    %c0_i32_1 = arith.constant 0 : i32
    return %arg0, %c0_i32, %c0_i32_0 : i32, i32, i32
  }
  func.func @transform_8(%arg0: i32) -> (i32, i32, i32) {
    %c0_i32 = arith.constant 0 : i32
    %c0_i32_0 = arith.constant 0 : i32
    %c0_i32_1 = arith.constant 0 : i32
    return %arg0, %c0_i32, %c0_i32_0 : i32, i32, i32
  }
  func.func @transform_9(%arg0: i32) -> (i32, i32, i32) {
    %c0_i32 = arith.constant 0 : i32
    %c0_i32_0 = arith.constant 0 : i32
    %c0_i32_1 = arith.constant 0 : i32
    return %arg0, %c0_i32, %c0_i32_0 : i32, i32, i32
  }
  func.func @transform_10(%arg0: i32) -> (i32, i32, i32) {
    %c0_i32 = arith.constant 0 : i32
    %c0_i32_0 = arith.constant 0 : i32
    %c0_i32_1 = arith.constant 0 : i32
    return %arg0, %c0_i32, %c0_i32_0 : i32, i32, i32
  }
  func.func @transform_11(%arg0: i32) -> (i32, i32, i32) {
    %c0_i32 = arith.constant 0 : i32
    %c0_i32_0 = arith.constant 0 : i32
    %c0_i32_1 = arith.constant 0 : i32
    return %arg0, %c0_i32, %c0_i32_0 : i32, i32, i32
  }
  func.func @transform_12(%arg0: i32) -> (i32, i32, i32) {
    %c0_i32 = arith.constant 0 : i32
    %c0_i32_0 = arith.constant 0 : i32
    %c0_i32_1 = arith.constant 0 : i32
    return %arg0, %c0_i32, %c0_i32_0 : i32, i32, i32
  }
  func.func @transform_13(%arg0: i32) -> (i32, i32, i32) {
    %c0_i32 = arith.constant 0 : i32
    %c0_i32_0 = arith.constant 0 : i32
    %c0_i32_1 = arith.constant 0 : i32
    return %arg0, %c0_i32, %c0_i32_0 : i32, i32, i32
  }
  func.func @transform_14(%arg0: i32) -> (i32, i32, i32) {
    %c0_i32 = arith.constant 0 : i32
    %c0_i32_0 = arith.constant 0 : i32
    %c0_i32_1 = arith.constant 0 : i32
    return %arg0, %c0_i32, %c0_i32_0 : i32, i32, i32
  }
  func.func @transform_15(%arg0: i32) -> (i32, i32, i32) {
    %c0_i32 = arith.constant 0 : i32
    %c0_i32_0 = arith.constant 0 : i32
    %c0_i32_1 = arith.constant 0 : i32
    return %arg0, %c0_i32, %c0_i32_0 : i32, i32, i32
  }
  func.func @transform_16(%arg0: i32) -> (i32, i32, i32) {
    %c0_i32 = arith.constant 0 : i32
    %c0_i32_0 = arith.constant 0 : i32
    %c0_i32_1 = arith.constant 0 : i32
    return %arg0, %c0_i32, %c0_i32_0 : i32, i32, i32
  }
  func.func @transform_17(%arg0: i32) -> (i32, i32, i32) {
    %c0_i32 = arith.constant 0 : i32
    %c0_i32_0 = arith.constant 0 : i32
    %c0_i32_1 = arith.constant 0 : i32
    return %arg0, %c0_i32, %c0_i32_0 : i32, i32, i32
  }
  func.func @transform_18(%arg0: i32) -> (i32, i32) {
    %c0_i32 = arith.constant 0 : i32
    %c0_i32_0 = arith.constant 0 : i32
    %c0_i32_1 = arith.constant 0 : i32
    return %c0_i32, %c0_i32_0 : i32, i32
  }
}

</mosaic_0001>

<llo_original>
// kernel: tpu_custom_call.1
$region0: #{tpu_custom_call.1}
  #allocation0 [shape = 'u32[]', space=smem, size = 0x4, offset = 0x4, fixed_abs, tag = 'smem constant byte address 0x4 - core index']
  #allocation1 [shape = 'u32[144,128]{1,0:T(1,128)}', space=vmem, size = 0x12000, scoped, tag = 'internal scratch']
  #allocation2 [shape = 'f32[24,32]{1,0:T(8,128)}', space=vmem, size = 0x3000, scoped, tag = 'scratch operand']
  %s0 = inlined_call_operand.vmem [shape: f32[24,32], index: 0, kind: input, shape index: {}]
  %s1 = inlined_call_operand.vmem [shape: f32[24,24], index: 1, kind: input, shape index: {}]
  %s2 = inlined_call_operand.vmem [shape: f32[2,24], index: 2, kind: input, shape index: {}]
  %s3 = inlined_call_operand.hbm [shape: f32[1,32], index: 3, kind: input, shape index: {}]
  %s4 = inlined_call_operand.hbm [shape: f32[1,32], index: 4, kind: input, shape index: {}]
  %s5 = inlined_call_operand.vmem [shape: bf16[32,32], index: 5, kind: input, shape index: {}]
  %s6 = inlined_call_operand.vmem [shape: f32[2,1,32], index: 6, kind: input, shape index: {}]
  %s7 = inlined_call_operand.vmem [shape: f32[2,1,32], index: 7, kind: input, shape index: {}]
  %s8 = inlined_call_operand.vmem [shape: bf16[2,32,96], index: 8, kind: input, shape index: {}]
  %s9 = inlined_call_operand.vmem [shape: f32[2,1,96], index: 9, kind: input, shape index: {}]
  %s10 = inlined_call_operand.vmem [shape: bf16[2,32,32], index: 10, kind: input, shape index: {}]
  %s11 = inlined_call_operand.vmem [shape: f32[2,1,32], index: 11, kind: input, shape index: {}]
  %s12 = inlined_call_operand.vmem [shape: f32[2,1,32], index: 12, kind: input, shape index: {}]
  %s13 = inlined_call_operand.vmem [shape: f32[2,1,32], index: 13, kind: input, shape index: {}]
  %s14 = inlined_call_operand.vmem [shape: bf16[2,32,128], index: 14, kind: input, shape index: {}]
  %s15 = inlined_call_operand.vmem [shape: f32[2,1,128], index: 15, kind: input, shape index: {}]
  %s16 = inlined_call_operand.vmem [shape: bf16[2,128,32], index: 16, kind: input, shape index: {}]
  %s17 = inlined_call_operand.vmem [shape: f32[2,1,32], index: 17, kind: input, shape index: {}]
  %s18 = inlined_call_operand.hbm [shape: f32[2,32], index: 18, kind: output, shape index: {}]
  %s19 = sld [smem:[#allocation0]]
  $region121: #{tpu_custom_call.1} parent=0
    _
  %s21 = ssub.s32 1, %s19
  %s22 = scalar_select 0, %s21, %s19
  $region1: #{tpu_custom_call.1} parent=0
    #allocation3 [shape = 'u8[512]{0}', space=vmem, size = 0x400, scoped, tag = 'input window, operand 3, single buffered']
    #allocation4 [shape = 's32[2]{0}', space=sflag, size = 0x8, scoped, tag = 'scoped memory for tpu_custom_call.1']
    #allocation5 [shape = 's32[2]{0}', space=sflag, size = 0x8, scoped, tag = 'scoped memory for tpu_custom_call.1']
    #allocation6 [shape = 'u8[512]{0}', space=vmem, size = 0x400, scoped, tag = 'input window, operand 4, single buffered']
    #allocation7 [shape = 's32[1]{0}', space=sflag, size = 0x4, scoped, tag = 'scoped memory for tpu_custom_call.1']
    #allocation8 [shape = 'u8[1024]{0}', space=vmem, size = 0x400, scoped, tag = 'output window, operand 0, single buffered']
    %23 = vsyncpa [#allocation4], 0
    %24 = vsyncpa [#allocation7], 0
    %25 = vsyncpa [#allocation5], 0
    loop: start=0, step=1, limit=4
    $region2: #{tpu_custom_call.1} parent=1 // loop_pre_header
      _
    $region3: #{tpu_custom_call.1} parent=1 // loop_header
      %s27 = sphi 0, %s31
      %p28 = scmp.ge.s32.totalorder %s27, 4
      %s35 = sphi 0, %s35
      %s37 = sphi 0, %s35
      %s38 = sphi 0, %s37
      %s52 = sphi 0, %s38
      %s56 = sphi 0, %s56
      %s58 = sphi 0, %s56
      %s59 = sphi 0, %s58
      %s73 = sphi 0, %s59
      %s77 = sphi 0, %s77
      %s79 = sphi 0, %s77
      %s80 = sphi 0, %s79
      %s94 = sphi 0, %s80
      %s98 = sphi 0, %s98
      %s100 = sphi 0, %s98
      %s101 = sphi 0, %s100
      %s115 = sphi 0, %s101
      %s119 = sphi 0, %s119
      %s121 = sphi 0, %s119
      %s122 = sphi 0, %s121
      %s136 = sphi 0, %s122
      %s140 = sphi 0, %s140
      %s142 = sphi 0, %s140
      %s143 = sphi 0, %s142
      %s157 = sphi 0, %s143
      %s163 = sphi 0, %s165
      %s166 = sphi 0, %s163
      %s167 = sphi 0, %s166
      %s183 = sphi 0, %s167
      %s189 = sphi 0, %s191
      %s192 = sphi 0, %s189
      %s193 = sphi 0, %s192
      %s209 = sphi 0, %s193
      %s215 = sphi 0, %s217
      %s218 = sphi 0, %s215
      %s219 = sphi 0, %s218
      %s235 = sphi 0, %s219
      %s241 = sphi 0, %s243
      %s244 = sphi 0, %s241
      %s245 = sphi 0, %s244
      %s261 = sphi 0, %s245
      %s267 = sphi 0, %s269
      %s270 = sphi 0, %s267
      %s271 = sphi 0, %s270
      %s287 = sphi 0, %s271
      %s293 = sphi 0, %s295
      %s296 = sphi 0, %s293
      %s297 = sphi 0, %s296
      %s313 = sphi 0, %s297
      %s319 = sphi 0, %s321
      %s322 = sphi 0, %s319
      %s323 = sphi 0, %s322
      %s339 = sphi 0, %s323
      %s345 = sphi 0, %s347
      %s348 = sphi 0, %s345
      %s349 = sphi 0, %s348
      %s365 = sphi 0, %s349
      %s371 = sphi 0, %s373
      %s374 = sphi 0, %s371
      %s375 = sphi 0, %s374
      %s391 = sphi 0, %s375
      %s397 = sphi 0, %s399
      %s400 = sphi 0, %s397
      %s401 = sphi 0, %s400
      %s417 = sphi 0, %s401
      %s423 = sphi 0, %s425
      %s426 = sphi 0, %s423
      %s427 = sphi 0, %s426
      %s443 = sphi 0, %s427
      %s449 = sphi 0, %s451
      %s452 = sphi 0, %s449
      %s453 = sphi 0, %s452
      %s469 = sphi 0, %s453
      %s473 = sphi 0, %s473
      %s475 = sphi 0, %s473
      %s476 = sphi 0, %s475
      %s490 = sphi 0, %s476
    $region4: #{tpu_custom_call.1} parent=1 // loop_header_branch
      %30 = sbr.rel (%p28) target = $region8
    $region5: #{tpu_custom_call.1} parent=1 // loop_body
      %s32 = ssub.s32 %s27, 1
      %s33 = ssub.s32 %s27, 2
      %s34 = sadd.s32 %s27, 1
      %s36 = sadd.s32 %s35, 1
      %p39 = scmp.eq.s32.totalorder %s27, 1
      %p40 = scmp.ne.s32.totalorder %s35, %s37
      %p41 = scmp.eq.s32.totalorder %s27, 0
      %p42 = por %p40, %p41
      %p43 = scmp.ne.s32.totalorder %s35, %s37
      %p44 = scmp.eq.s32.totalorder %s32, 1
      %p45 = por %p43, %p44
      %p46 = scmp.ne.s32.totalorder %s37, %s38
      %p47 = scmp.eq.s32.totalorder %s32, 0
      %p48 = por %p46, %p47
      %p49 = scmp.ne.s32.totalorder %s37, %s38
      %p50 = scmp.eq.s32.totalorder %s33, 1
      %p51 = por %p49, %p50
      %p53 = scmp.ne.s32.totalorder %s38, %s52
      %p54 = scmp.eq.s32.totalorder %s33, 0
      %p55 = por %p53, %p54
      %s57 = sadd.s32 %s56, 1
      %p60 = scmp.eq.s32.totalorder %s27, 1
      %p61 = scmp.ne.s32.totalorder %s56, %s58
      %p62 = scmp.eq.s32.totalorder %s27, 0
      %p63 = por %p61, %p62
      %p64 = scmp.ne.s32.totalorder %s56, %s58
      %p65 = scmp.eq.s32.totalorder %s32, 1
      %p66 = por %p64, %p65
      %p67 = scmp.ne.s32.totalorder %s58, %s59
      %p68 = scmp.eq.s32.totalorder %s32, 0
      %p69 = por %p67, %p68
      %p70 = scmp.ne.s32.totalorder %s58, %s59
      %p71 = scmp.eq.s32.totalorder %s33, 1
      %p72 = por %p70, %p71
      %p74 = scmp.ne.s32.totalorder %s59, %s73
      %p75 = scmp.eq.s32.totalorder %s33, 0
      %p76 = por %p74, %p75
      %s78 = sadd.s32 %s77, 1
      %p81 = scmp.eq.s32.totalorder %s27, 1
      %p82 = scmp.ne.s32.totalorder %s77, %s79
      %p83 = scmp.eq.s32.totalorder %s27, 0
      %p84 = por %p82, %p83
      %p85 = scmp.ne.s32.totalorder %s77, %s79
      %p86 = scmp.eq.s32.totalorder %s32, 1
      %p87 = por %p85, %p86
      %p88 = scmp.ne.s32.totalorder %s79, %s80
      %p89 = scmp.eq.s32.totalorder %s32, 0
      %p90 = por %p88, %p89
      %p91 = scmp.ne.s32.totalorder %s79, %s80
      %p92 = scmp.eq.s32.totalorder %s33, 1
      %p93 = por %p91, %p92
      %p95 = scmp.ne.s32.totalorder %s80, %s94
      %p96 = scmp.eq.s32.totalorder %s33, 0
      %p97 = por %p95, %p96
      %s99 = sadd.s32 %s98, 1
      %p102 = scmp.eq.s32.totalorder %s27, 1
      %p103 = scmp.ne.s32.totalorder %s98, %s100
      %p104 = scmp.eq.s32.totalorder %s27, 0
      %p105 = por %p103, %p104
      %p106 = scmp.ne.s32.totalorder %s98, %s100
      %p107 = scmp.eq.s32.totalorder %s32, 1
      %p108 = por %p106, %p107
      %p109 = scmp.ne.s32.totalorder %s100, %s101
      %p110 = scmp.eq.s32.totalorder %s32, 0
      %p111 = por %p109, %p110
      %p112 = scmp.ne.s32.totalorder %s100, %s101
      %p113 = scmp.eq.s32.totalorder %s33, 1
      %p114 = por %p112, %p113
      %p116 = scmp.ne.s32.totalorder %s101, %s115
      %p117 = scmp.eq.s32.totalorder %s33, 0
      %p118 = por %p116, %p117
      %s120 = sadd.s32 %s119, 1
      %p123 = scmp.eq.s32.totalorder %s27, 1
      %p124 = scmp.ne.s32.totalorder %s119, %s121
      %p125 = scmp.eq.s32.totalorder %s27, 0
      %p126 = por %p124, %p125
      %p127 = scmp.ne.s32.totalorder %s119, %s121
      %p128 = scmp.eq.s32.totalorder %s32, 1
      %p129 = por %p127, %p128
      %p130 = scmp.ne.s32.totalorder %s121, %s122
      %p131 = scmp.eq.s32.totalorder %s32, 0
      %p132 = por %p130, %p131
      %p133 = scmp.ne.s32.totalorder %s121, %s122
      %p134 = scmp.eq.s32.totalorder %s33, 1
      %p135 = por %p133, %p134
      %p137 = scmp.ne.s32.totalorder %s122, %s136
      %p138 = scmp.eq.s32.totalorder %s33, 0
      %p139 = por %p137, %p138
      %s141 = sadd.s32 %s140, 1
      %p144 = scmp.eq.s32.totalorder %s27, 1
      %p145 = scmp.ne.s32.totalorder %s140, %s142
      %p146 = scmp.eq.s32.totalorder %s27, 0
      %p147 = por %p145, %p146
      %p148 = scmp.ne.s32.totalorder %s140, %s142
      %p149 = scmp.eq.s32.totalorder %s32, 1
      %p150 = por %p148, %p149
      %p151 = scmp.ne.s32.totalorder %s142, %s143
      %p152 = scmp.eq.s32.totalorder %s32, 0
      %p153 = por %p151, %p152
      %p154 = scmp.ne.s32.totalorder %s142, %s143
      %p155 = scmp.eq.s32.totalorder %s33, 1
      %p156 = por %p154, %p155
      %p158 = scmp.ne.s32.totalorder %s143, %s157
      %p159 = scmp.eq.s32.totalorder %s33, 0
      %p160 = por %p158, %p159
      %s161 = ssub.s32 %s27, %s34
      %p162 = scmp.eq.s32.totalorder %s161, 0
      %s164 = sadd.s32 %s163, 1
      %s165 = scalar_select %p162, %s163, %s164
      %p168 = pneg %p162
      %p169 = scmp.eq.s32.totalorder %s27, 1
      %p170 = por %p168, %p169
      %p171 = scmp.ne.s32.totalorder %s163, %s166
      %p172 = scmp.eq.s32.totalorder %s27, 0
      %p173 = por %p171, %p172
      %p174 = scmp.ne.s32.totalorder %s163, %s166
      %p175 = scmp.eq.s32.totalorder %s32, 1
      %p176 = por %p174, %p175
      %p177 = scmp.ne.s32.totalorder %s166, %s167
      %p178 = scmp.eq.s32.totalorder %s32, 0
      %p179 = por %p177, %p178
      %p180 = scmp.ne.s32.totalorder %s166, %s167
      %p181 = scmp.eq.s32.totalorder %s33, 1
      %p182 = por %p180, %p181
      %p184 = scmp.ne.s32.totalorder %s167, %s183
      %p185 = scmp.eq.s32.totalorder %s33, 0
      %p186 = por %p184, %p185
      %s187 = ssub.s32 %s27, %s34
      %p188 = scmp.eq.s32.totalorder %s187, 0
      %s190 = sadd.s32 %s189, 1
      %s191 = scalar_select %p188, %s189, %s190
      %p194 = pneg %p188
      %p195 = scmp.eq.s32.totalorder %s27, 1
      %p196 = por %p194, %p195
      %p197 = scmp.ne.s32.totalorder %s189, %s192
      %p198 = scmp.eq.s32.totalorder %s27, 0
      %p199 = por %p197, %p198
      %p200 = scmp.ne.s32.totalorder %s189, %s192
      %p201 = scmp.eq.s32.totalorder %s32, 1
      %p202 = por %p200, %p201
      %p203 = scmp.ne.s32.totalorder %s192, %s193
      %p204 = scmp.eq.s32.totalorder %s32, 0
      %p205 = por %p203, %p204
      %p206 = scmp.ne.s32.totalorder %s192, %s193
      %p207 = scmp.eq.s32.totalorder %s33, 1
      %p208 = por %p206, %p207
      %p210 = scmp.ne.s32.totalorder %s193, %s209
      %p211 = scmp.eq.s32.totalorder %s33, 0
      %p212 = por %p210, %p211
      %s213 = ssub.s32 %s27, %s34
      %p214 = scmp.eq.s32.totalorder %s213, 0
      %s216 = sadd.s32 %s215, 1
      %s217 = scalar_select %p214, %s215, %s216
      %p220 = pneg %p214
      %p221 = scmp.eq.s32.totalorder %s27, 1
      %p222 = por %p220, %p221
      %p223 = scmp.ne.s32.totalorder %s215, %s218
      %p224 = scmp.eq.s32.totalorder %s27, 0
      %p225 = por %p223, %p224
      %p226 = scmp.ne.s32.totalorder %s215, %s218
      %p227 = scmp.eq.s32.totalorder %s32, 1
      %p228 = por %p226, %p227
      %p229 = scmp.ne.s32.totalorder %s218, %s219
      %p230 = scmp.eq.s32.totalorder %s32, 0
      %p231 = por %p229, %p230
      %p232 = scmp.ne.s32.totalorder %s218, %s219
      %p233 = scmp.eq.s32.totalorder %s33, 1
      %p234 = por %p232, %p233
      %p236 = scmp.ne.s32.totalorder %s219, %s235
      %p237 = scmp.eq.s32.totalorder %s33, 0
      %p238 = por %p236, %p237
      %s239 = ssub.s32 %s27, %s34
      %p240 = scmp.eq.s32.totalorder %s239, 0
      %s242 = sadd.s32 %s241, 1
      %s243 = scalar_select %p240, %s241, %s242
      %p246 = pneg %p240
      %p247 = scmp.eq.s32.totalorder %s27, 1
      %p248 = por %p246, %p247
      %p249 = scmp.ne.s32.totalorder %s241, %s244
      %p250 = scmp.eq.s32.totalorder %s27, 0
      %p251 = por %p249, %p250
      %p252 = scmp.ne.s32.totalorder %s241, %s244
      %p253 = scmp.eq.s32.totalorder %s32, 1
      %p254 = por %p252, %p253
      %p255 = scmp.ne.s32.totalorder %s244, %s245
      %p256 = scmp.eq.s32.totalorder %s32, 0
      %p257 = por %p255, %p256
      %p258 = scmp.ne.s32.totalorder %s244, %s245
      %p259 = scmp.eq.s32.totalorder %s33, 1
      %p260 = por %p258, %p259
      %p262 = scmp.ne.s32.totalorder %s245, %s261
      %p263 = scmp.eq.s32.totalorder %s33, 0
      %p264 = por %p262, %p263
      %s265 = ssub.s32 %s27, %s34
      %p266 = scmp.eq.s32.totalorder %s265, 0
      %s268 = sadd.s32 %s267, 1
      %s269 = scalar_select %p266, %s267, %s268
      %p272 = pneg %p266
      %p273 = scmp.eq.s32.totalorder %s27, 1
      %p274 = por %p272, %p273
      %p275 = scmp.ne.s32.totalorder %s267, %s270
      %p276 = scmp.eq.s32.totalorder %s27, 0
      %p277 = por %p275, %p276
      %p278 = scmp.ne.s32.totalorder %s267, %s270
      %p279 = scmp.eq.s32.totalorder %s32, 1
      %p280 = por %p278, %p279
      %p281 = scmp.ne.s32.totalorder %s270, %s271
      %p282 = scmp.eq.s32.totalorder %s32, 0
      %p283 = por %p281, %p282
      %p284 = scmp.ne.s32.totalorder %s270, %s271
      %p285 = scmp.eq.s32.totalorder %s33, 1
      %p286 = por %p284, %p285
      %p288 = scmp.ne.s32.totalorder %s271, %s287
      %p289 = scmp.eq.s32.totalorder %s33, 0
      %p290 = por %p288, %p289
      %s291 = ssub.s32 %s27, %s34
      %p292 = scmp.eq.s32.totalorder %s291, 0
      %s294 = sadd.s32 %s293, 1
      %s295 = scalar_select %p292, %s293, %s294
      %p298 = pneg %p292
      %p299 = scmp.eq.s32.totalorder %s27, 1
      %p300 = por %p298, %p299
      %p301 = scmp.ne.s32.totalorder %s293, %s296
      %p302 = scmp.eq.s32.totalorder %s27, 0
      %p303 = por %p301, %p302
      %p304 = scmp.ne.s32.totalorder %s293, %s296
      %p305 = scmp.eq.s32.totalorder %s32, 1
      %p306 = por %p304, %p305
      %p307 = scmp.ne.s32.totalorder %s296, %s297
      %p308 = scmp.eq.s32.totalorder %s32, 0
      %p309 = por %p307, %p308
      %p310 = scmp.ne.s32.totalorder %s296, %s297
      %p311 = scmp.eq.s32.totalorder %s33, 1
      %p312 = por %p310, %p311
      %p314 = scmp.ne.s32.totalorder %s297, %s313
      %p315 = scmp.eq.s32.totalorder %s33, 0
      %p316 = por %p314, %p315
      %s317 = ssub.s32 %s27, %s34
      %p318 = scmp.eq.s32.totalorder %s317, 0
      %s320 = sadd.s32 %s319, 1
      %s321 = scalar_select %p318, %s319, %s320
      %p324 = pneg %p318
      %p325 = scmp.eq.s32.totalorder %s27, 1
      %p326 = por %p324, %p325
      %p327 = scmp.ne.s32.totalorder %s319, %s322
      %p328 = scmp.eq.s32.totalorder %s27, 0
      %p329 = por %p327, %p328
      %p330 = scmp.ne.s32.totalorder %s319, %s322
      %p331 = scmp.eq.s32.totalorder %s32, 1
      %p332 = por %p330, %p331
      %p333 = scmp.ne.s32.totalorder %s322, %s323
      %p334 = scmp.eq.s32.totalorder %s32, 0
      %p335 = por %p333, %p334
      %p336 = scmp.ne.s32.totalorder %s322, %s323
      %p337 = scmp.eq.s32.totalorder %s33, 1
      %p338 = por %p336, %p337
      %p340 = scmp.ne.s32.totalorder %s323, %s339
      %p341 = scmp.eq.s32.totalorder %s33, 0
      %p342 = por %p340, %p341
      %s343 = ssub.s32 %s27, %s34
      %p344 = scmp.eq.s32.totalorder %s343, 0
      %s346 = sadd.s32 %s345, 1
      %s347 = scalar_select %p344, %s345, %s346
      %p350 = pneg %p344
      %p351 = scmp.eq.s32.totalorder %s27, 1
      %p352 = por %p350, %p351
      %p353 = scmp.ne.s32.totalorder %s345, %s348
      %p354 = scmp.eq.s32.totalorder %s27, 0
      %p355 = por %p353, %p354
      %p356 = scmp.ne.s32.totalorder %s345, %s348
      %p357 = scmp.eq.s32.totalorder %s32, 1
      %p358 = por %p356, %p357
      %p359 = scmp.ne.s32.totalorder %s348, %s349
      %p360 = scmp.eq.s32.totalorder %s32, 0
      %p361 = por %p359, %p360
      %p362 = scmp.ne.s32.totalorder %s348, %s349
      %p363 = scmp.eq.s32.totalorder %s33, 1
      %p364 = por %p362, %p363
      %p366 = scmp.ne.s32.totalorder %s349, %s365
      %p367 = scmp.eq.s32.totalorder %s33, 0
      %p368 = por %p366, %p367
      %s369 = ssub.s32 %s27, %s34
      %p370 = scmp.eq.s32.totalorder %s369, 0
      %s372 = sadd.s32 %s371, 1
      %s373 = scalar_select %p370, %s371, %s372
      %p376 = pneg %p370
      %p377 = scmp.eq.s32.totalorder %s27, 1
      %p378 = por %p376, %p377
      %p379 = scmp.ne.s32.totalorder %s371, %s374
      %p380 = scmp.eq.s32.totalorder %s27, 0
      %p381 = por %p379, %p380
      %p382 = scmp.ne.s32.totalorder %s371, %s374
      %p383 = scmp.eq.s32.totalorder %s32, 1
      %p384 = por %p382, %p383
      %p385 = scmp.ne.s32.totalorder %s374, %s375
      %p386 = scmp.eq.s32.totalorder %s32, 0
      %p387 = por %p385, %p386
      %p388 = scmp.ne.s32.totalorder %s374, %s375
      %p389 = scmp.eq.s32.totalorder %s33, 1
      %p390 = por %p388, %p389
      %p392 = scmp.ne.s32.totalorder %s375, %s391
      %p393 = scmp.eq.s32.totalorder %s33, 0
      %p394 = por %p392, %p393
      %s395 = ssub.s32 %s27, %s34
      %p396 = scmp.eq.s32.totalorder %s395, 0
      %s398 = sadd.s32 %s397, 1
      %s399 = scalar_select %p396, %s397, %s398
      %p402 = pneg %p396
      %p403 = scmp.eq.s32.totalorder %s27, 1
      %p404 = por %p402, %p403
      %p405 = scmp.ne.s32.totalorder %s397, %s400
      %p406 = scmp.eq.s32.totalorder %s27, 0
      %p407 = por %p405, %p406
      %p408 = scmp.ne.s32.totalorder %s397, %s400
      %p409 = scmp.eq.s32.totalorder %s32, 1
      %p410 = por %p408, %p409
      %p411 = scmp.ne.s32.totalorder %s400, %s401
      %p412 = scmp.eq.s32.totalorder %s32, 0
      %p413 = por %p411, %p412
      %p414 = scmp.ne.s32.totalorder %s400, %s401
      %p415 = scmp.eq.s32.totalorder %s33, 1
      %p416 = por %p414, %p415
      %p418 = scmp.ne.s32.totalorder %s401, %s417
      %p419 = scmp.eq.s32.totalorder %s33, 0
      %p420 = por %p418, %p419
      %s421 = ssub.s32 %s27, %s34
      %p422 = scmp.eq.s32.totalorder %s421, 0
      %s424 = sadd.s32 %s423, 1
      %s425 = scalar_select %p422, %s423, %s424
      %p428 = pneg %p422
      %p429 = scmp.eq.s32.totalorder %s27, 1
      %p430 = por %p428, %p429
      %p431 = scmp.ne.s32.totalorder %s423, %s426
      %p432 = scmp.eq.s32.totalorder %s27, 0
      %p433 = por %p431, %p432
      %p434 = scmp.ne.s32.totalorder %s423, %s426
      %p435 = scmp.eq.s32.totalorder %s32, 1
      %p436 = por %p434, %p435
      %p437 = scmp.ne.s32.totalorder %s426, %s427
      %p438 = scmp.eq.s32.totalorder %s32, 0
      %p439 = por %p437, %p438
      %p440 = scmp.ne.s32.totalorder %s426, %s427
      %p441 = scmp.eq.s32.totalorder %s33, 1
      %p442 = por %p440, %p441
      %p444 = scmp.ne.s32.totalorder %s427, %s443
      %p445 = scmp.eq.s32.totalorder %s33, 0
      %p446 = por %p444, %p445
      %s447 = ssub.s32 %s27, %s34
      %p448 = scmp.eq.s32.totalorder %s447, 0
      %s450 = sadd.s32 %s449, 1
      %s451 = scalar_select %p448, %s449, %s450
      %p454 = pneg %p448
      %p455 = scmp.eq.s32.totalorder %s27, 1
      %p456 = por %p454, %p455
      %p457 = scmp.ne.s32.totalorder %s449, %s452
      %p458 = scmp.eq.s32.totalorder %s27, 0
      %p459 = por %p457, %p458
      %p460 = scmp.ne.s32.totalorder %s449, %s452
      %p461 = scmp.eq.s32.totalorder %s32, 1
      %p462 = por %p460, %p461
      %p463 = scmp.ne.s32.totalorder %s452, %s453
      %p464 = scmp.eq.s32.totalorder %s32, 0
      %p465 = por %p463, %p464
      %p466 = scmp.ne.s32.totalorder %s452, %s453
      %p467 = scmp.eq.s32.totalorder %s33, 1
      %p468 = por %p466, %p467
      %p470 = scmp.ne.s32.totalorder %s453, %s469
      %p471 = scmp.eq.s32.totalorder %s33, 0
      %p472 = por %p470, %p471
      %s474 = sadd.s32 %s473, 1
      %p477 = scmp.eq.s32.totalorder %s27, 1
      %p478 = scmp.ne.s32.totalorder %s473, %s475
      %p479 = scmp.eq.s32.totalorder %s27, 0
      %p480 = por %p478, %p479
      %p481 = scmp.ne.s32.totalorder %s473, %s475
      %p482 = scmp.eq.s32.totalorder %s32, 1
      %p483 = por %p481, %p482
      %p484 = scmp.ne.s32.totalorder %s475, %s476
      %p485 = scmp.eq.s32.totalorder %s32, 0
      %p486 = por %p484, %p485
      %p487 = scmp.ne.s32.totalorder %s475, %s476
      %p488 = scmp.eq.s32.totalorder %s33, 1
      %p489 = por %p487, %p488
      %p491 = scmp.ne.s32.totalorder %s476, %s490
      %p492 = scmp.eq.s32.totalorder %s33, 0
      %p493 = por %p491, %p492
      %p494 = scmp.le.s32.totalorder 1, %s27
      %p495 = scmp.lt.s32.totalorder %s27, 3
      %p496 = pnand %p494, %p495
      %p497 = pneg %p496
      // Predicated region
      $region9: #{tpu_custom_call.1} parent=5 // pred_check
        _
      $region10: #{tpu_custom_call.1} parent=5 // pred_check_branch
        %499 = sbr.rel (%p496) target = $region12
      $region11: #{tpu_custom_call.1} parent=5 // pred_region
        %s500 = ssub.s32 %s27, 1
        // Predicated region
        $region13: #{tpu_custom_call.1} parent=11 // pred_check
          %p501 = pneg %p48
        $region14: #{tpu_custom_call.1} parent=11 // pred_check_branch
          %503 = sbr.rel (%p501) target = $region16
        $region15: #{tpu_custom_call.1} parent=11 // pred_region
          _
        $region16: #{tpu_custom_call.1} parent=11 // pred_fallthru
          _
        // Predicated region
        $region17: #{tpu_custom_call.1} parent=11 // pred_check
          %p504 = pneg %p69
        $region18: #{tpu_custom_call.1} parent=11 // pred_check_branch
          %506 = sbr.rel (%p504) target = $region20
        $region19: #{tpu_custom_call.1} parent=11 // pred_region
          _
        $region20: #{tpu_custom_call.1} parent=11 // pred_fallthru
          _
        // Predicated region
        $region21: #{tpu_custom_call.1} parent=11 // pred_check
          %p507 = pneg %p90
        $region22: #{tpu_custom_call.1} parent=11 // pred_check_branch
          %509 = sbr.rel (%p507) target = $region24
        $region23: #{tpu_custom_call.1} parent=11 // pred_region
          _
        $region24: #{tpu_custom_call.1} parent=11 // pred_fallthru
          _
        // Predicated region
        $region25: #{tpu_custom_call.1} parent=11 // pred_check
          %p510 = pneg %p111
        $region26: #{tpu_custom_call.1} parent=11 // pred_check_branch
          %512 = sbr.rel (%p510) target = $region28
        $region27: #{tpu_custom_call.1} parent=11 // pred_region
          %s514 = ssub.s32 16, 16
          %515 = vsyncadd [#allocation4], %s514
          %s517 = sshll.u32 [#allocation3], 4
          %s518 = int_to_ptr.vmem [resolvable:$true] %s517
          %520 = dma.hbm_to_vmem [thread:$0]  %s3, 16, %s518, [#allocation4]
        $region28: #{tpu_custom_call.1} parent=11 // pred_fallthru
          _
        // Predicated region
        $region29: #{tpu_custom_call.1} parent=11 // pred_check
          %p521 = pneg %p132
        $region30: #{tpu_custom_call.1} parent=11 // pred_check_branch
          %523 = sbr.rel (%p521) target = $region32
        $region31: #{tpu_custom_call.1} parent=11 // pred_region
          %s525 = ssub.s32 16, 16
          %526 = vsyncadd [#allocation7], %s525
          %s528 = sshll.u32 [#allocation6], 4
          %s529 = int_to_ptr.vmem [resolvable:$true] %s528
          %531 = dma.hbm_to_vmem [thread:$0]  %s4, 16, %s529, [#allocation7]
        $region32: #{tpu_custom_call.1} parent=11 // pred_fallthru
          _
        // Predicated region
        $region33: #{tpu_custom_call.1} parent=11 // pred_check
          %p532 = pneg %p153
        $region34: #{tpu_custom_call.1} parent=11 // pred_check_branch
          %534 = sbr.rel (%p532) target = $region36
        $region35: #{tpu_custom_call.1} parent=11 // pred_region
          _
        $region36: #{tpu_custom_call.1} parent=11 // pred_fallthru
          _
      $region12: #{tpu_custom_call.1} parent=5 // pred_fallthru
        _
      %p535 = scmp.lt.s32.totalorder %s27, 2
      // Predicated region
      $region37: #{tpu_custom_call.1} parent=5 // pred_check
        %p536 = pneg %p535
      $region38: #{tpu_custom_call.1} parent=5 // pred_check_branch
        %538 = sbr.rel (%p536) target = $region40
      $region39: #{tpu_custom_call.1} parent=5 // pred_region
        // Predicated region
        $region41: #{tpu_custom_call.1} parent=39 // pred_check
          %p539 = pneg %p173
        $region42: #{tpu_custom_call.1} parent=39 // pred_check_branch
          %541 = sbr.rel (%p539) target = $region44
        $region43: #{tpu_custom_call.1} parent=39 // pred_region
          %p542 = scmp.lt.s32.totalorder %s27, 1
          %s543 = scalar_select %p542, %s27, 1
          %s544 = scalar_lea.vmem %s6, %s543
        $region44: #{tpu_custom_call.1} parent=39 // pred_fallthru
          _
        // Predicated region
        $region45: #{tpu_custom_call.1} parent=39 // pred_check
          %p545 = pneg %p199
        $region46: #{tpu_custom_call.1} parent=39 // pred_check_branch
          %547 = sbr.rel (%p545) target = $region48
        $region47: #{tpu_custom_call.1} parent=39 // pred_region
          %p548 = scmp.lt.s32.totalorder %s27, 1
          %s549 = scalar_select %p548, %s27, 1
          %s550 = scalar_lea.vmem %s7, %s549
        $region48: #{tpu_custom_call.1} parent=39 // pred_fallthru
          _
        // Predicated region
        $region49: #{tpu_custom_call.1} parent=39 // pred_check
          %p551 = pneg %p225
        $region50: #{tpu_custom_call.1} parent=39 // pred_check_branch
          %553 = sbr.rel (%p551) target = $region52
        $region51: #{tpu_custom_call.1} parent=39 // pred_region
          %p554 = scmp.lt.s32.totalorder %s27, 1
          %s555 = scalar_select %p554, %s27, 1
          %s556 = smul.addr %s555, 4
          %s557 = smul.addr %s556, 4
          %s558 = scalar_lea.vmem %s8, %s557
        $region52: #{tpu_custom_call.1} parent=39 // pred_fallthru
          _
        // Predicated region
        $region53: #{tpu_custom_call.1} parent=39 // pred_check
          %p559 = pneg %p251
        $region54: #{tpu_custom_call.1} parent=39 // pred_check_branch
          %561 = sbr.rel (%p559) target = $region56
        $region55: #{tpu_custom_call.1} parent=39 // pred_region
          %p562 = scmp.lt.s32.totalorder %s27, 1
          %s563 = scalar_select %p562, %s27, 1
          %s564 = scalar_lea.vmem %s9, %s563
        $region56: #{tpu_custom_call.1} parent=39 // pred_fallthru
          _
        // Predicated region
        $region57: #{tpu_custom_call.1} parent=39 // pred_check
          %p565 = pneg %p277
        $region58: #{tpu_custom_call.1} parent=39 // pred_check_branch
          %567 = sbr.rel (%p565) target = $region60
        $region59: #{tpu_custom_call.1} parent=39 // pred_region
          %p568 = scmp.lt.s32.totalorder %s27, 1
          %s569 = scalar_select %p568, %s27, 1
          %s570 = smul.addr %s569, 4
          %s571 = smul.addr %s570, 4
          %s572 = scalar_lea.vmem %s10, %s571
        $region60: #{tpu_custom_call.1} parent=39 // pred_fallthru
          _
        // Predicated region
        $region61: #{tpu_custom_call.1} parent=39 // pred_check
          %p573 = pneg %p303
        $region62: #{tpu_custom_call.1} parent=39 // pred_check_branch
          %575 = sbr.rel (%p573) target = $region64
        $region63: #{tpu_custom_call.1} parent=39 // pred_region
          %p576 = scmp.lt.s32.totalorder %s27, 1
          %s577 = scalar_select %p576, %s27, 1
          %s578 = scalar_lea.vmem %s11, %s577
        $region64: #{tpu_custom_call.1} parent=39 // pred_fallthru
          _
        // Predicated region
        $region65: #{tpu_custom_call.1} parent=39 // pred_check
          %p579 = pneg %p329
        $region66: #{tpu_custom_call.1} parent=39 // pred_check_branch
          %581 = sbr.rel (%p579) target = $region68
        $region67: #{tpu_custom_call.1} parent=39 // pred_region
          %p582 = scmp.lt.s32.totalorder %s27, 1
          %s583 = scalar_select %p582, %s27, 1
          %s584 = scalar_lea.vmem %s12, %s583
        $region68: #{tpu_custom_call.1} parent=39 // pred_fallthru
          _
        // Predicated region
        $region69: #{tpu_custom_call.1} parent=39 // pred_check
          %p585 = pneg %p355
        $region70: #{tpu_custom_call.1} parent=39 // pred_check_branch
          %587 = sbr.rel (%p585) target = $region72
        $region71: #{tpu_custom_call.1} parent=39 // pred_region
          %p588 = scmp.lt.s32.totalorder %s27, 1
          %s589 = scalar_select %p588, %s27, 1
          %s590 = scalar_lea.vmem %s13, %s589
        $region72: #{tpu_custom_call.1} parent=39 // pred_fallthru
          _
        // Predicated region
        $region73: #{tpu_custom_call.1} parent=39 // pred_check
          %p591 = pneg %p381
        $region74: #{tpu_custom_call.1} parent=39 // pred_check_branch
          %593 = sbr.rel (%p591) target = $region76
        $region75: #{tpu_custom_call.1} parent=39 // pred_region
          %p594 = scmp.lt.s32.totalorder %s27, 1
          %s595 = scalar_select %p594, %s27, 1
          %s596 = smul.addr %s595, 4
          %s597 = smul.addr %s596, 4
          %s598 = scalar_lea.vmem %s14, %s597
        $region76: #{tpu_custom_call.1} parent=39 // pred_fallthru
          _
        // Predicated region
        $region77: #{tpu_custom_call.1} parent=39 // pred_check
          %p599 = pneg %p407
        $region78: #{tpu_custom_call.1} parent=39 // pred_check_branch
          %601 = sbr.rel (%p599) target = $region80
        $region79: #{tpu_custom_call.1} parent=39 // pred_region
          %p602 = scmp.lt.s32.totalorder %s27, 1
          %s603 = scalar_select %p602, %s27, 1
          %s604 = scalar_lea.vmem %s15, %s603
        $region80: #{tpu_custom_call.1} parent=39 // pred_fallthru
          _
        // Predicated region
        $region81: #{tpu_custom_call.1} parent=39 // pred_check
          %p605 = pneg %p433
        $region82: #{tpu_custom_call.1} parent=39 // pred_check_branch
          %607 = sbr.rel (%p605) target = $region84
        $region83: #{tpu_custom_call.1} parent=39 // pred_region
          %p608 = scmp.lt.s32.totalorder %s27, 1
          %s609 = scalar_select %p608, %s27, 1
          %s610 = smul.addr %s609, 16
          %s611 = smul.addr %s610, 4
          %s612 = scalar_lea.vmem %s16, %s611
        $region84: #{tpu_custom_call.1} parent=39 // pred_fallthru
          _
        // Predicated region
        $region85: #{tpu_custom_call.1} parent=39 // pred_check
          %p613 = pneg %p459
        $region86: #{tpu_custom_call.1} parent=39 // pred_check_branch
          %615 = sbr.rel (%p613) target = $region88
        $region87: #{tpu_custom_call.1} parent=39 // pred_region
          %p616 = scmp.lt.s32.totalorder %s27, 1
          %s617 = scalar_select %p616, %s27, 1
          %s618 = scalar_lea.vmem %s17, %s617
        $region88: #{tpu_custom_call.1} parent=39 // pred_fallthru
          _
      $region40: #{tpu_custom_call.1} parent=5 // pred_fallthru
        _
      %p619 = scmp.le.s32.totalorder 1, %s27
      %p620 = scmp.lt.s32.totalorder %s27, 3
      %p621 = pnand %p619, %p620
      %p622 = pneg %p621
      // Predicated region
      $region89: #{tpu_custom_call.1} parent=5 // pred_check
        _
      $region90: #{tpu_custom_call.1} parent=5 // pred_check_branch
        %624 = sbr.rel (%p621) target = $region92
      $region91: #{tpu_custom_call.1} parent=5 // pred_region
        %s625 = ssub.s32 %s27, 1
        // Predicated region
        $region93: #{tpu_custom_call.1} parent=91 // pred_check
          %p626 = pneg %p111
        $region94: #{tpu_custom_call.1} parent=91 // pred_check_branch
          %628 = sbr.rel (%p626) target = $region96
        $region95: #{tpu_custom_call.1} parent=91 // pred_region
          %629 = dma.done [#allocation4], 16
        $region96: #{tpu_custom_call.1} parent=91 // pred_fallthru
          _
        // Predicated region
        $region97: #{tpu_custom_call.1} parent=91 // pred_check
          %p630 = pneg %p132
        $region98: #{tpu_custom_call.1} parent=91 // pred_check_branch
          %632 = sbr.rel (%p630) target = $region100
        $region99: #{tpu_custom_call.1} parent=91 // pred_region
          %633 = dma.done [#allocation7], 16
        $region100: #{tpu_custom_call.1} parent=91 // pred_fallthru
          _
        %p634 = pneg %p48
        %p635 = pneg %p45
        %p636 = pneg %p69
        %p637 = pneg %p66
        %p638 = pneg %p90
        %p639 = pneg %p87
        %p640 = pneg %p111
        %p641 = pneg %p108
        %p642 = pneg %p132
        %p643 = pneg %p129
        %p644 = pneg %p153
        %p645 = pneg %p150
        %p646 = scmp.lt.s32.totalorder %s32, 1
        %s647 = scalar_select %p646, %s32, 1
        %s648 = scalar_lea.vmem %s6, %s647
        %p649 = pneg %p179
        %p650 = pneg %p176
        %p651 = scmp.lt.s32.totalorder %s32, 1
        %s652 = scalar_select %p651, %s32, 1
        %s653 = scalar_lea.vmem %s7, %s652
        %p654 = pneg %p205
        %p655 = pneg %p202
        %p656 = scmp.lt.s32.totalorder %s32, 1
        %s657 = scalar_select %p656, %s32, 1
        %s658 = smul.addr %s657, 4
        %s659 = smul.addr %s658, 4
        %s660 = scalar_lea.vmem %s8, %s659
        %p661 = pneg %p231
        %p662 = pneg %p228
        %p663 = scmp.lt.s32.totalorder %s32, 1
        %s664 = scalar_select %p663, %s32, 1
        %s665 = scalar_lea.vmem %s9, %s664
        %p666 = pneg %p257
        %p667 = pneg %p254
        %p668 = scmp.lt.s32.totalorder %s32, 1
        %s669 = scalar_select %p668, %s32, 1
        %s670 = smul.addr %s669, 4
        %s671 = smul.addr %s670, 4
        %s672 = scalar_lea.vmem %s10, %s671
        %p673 = pneg %p283
        %p674 = pneg %p280
        %p675 = scmp.lt.s32.totalorder %s32, 1
        %s676 = scalar_select %p675, %s32, 1
        %s677 = scalar_lea.vmem %s11, %s676
        %p678 = pneg %p309
        %p679 = pneg %p306
        %p680 = scmp.lt.s32.totalorder %s32, 1
        %s681 = scalar_select %p680, %s32, 1
        %s682 = scalar_lea.vmem %s12, %s681
        %p683 = pneg %p335
        %p684 = pneg %p332
        %p685 = scmp.lt.s32.totalorder %s32, 1
        %s686 = scalar_select %p685, %s32, 1
        %s687 = scalar_lea.vmem %s13, %s686
        %p688 = pneg %p361
        %p689 = pneg %p358
        %p690 = scmp.lt.s32.totalorder %s32, 1
        %s691 = scalar_select %p690, %s32, 1
        %s692 = smul.addr %s691, 4
        %s693 = smul.addr %s692, 4
        %s694 = scalar_lea.vmem %s14, %s693
        %p695 = pneg %p387
        %p696 = pneg %p384
        %p697 = scmp.lt.s32.totalorder %s32, 1
        %s698 = scalar_select %p697, %s32, 1
        %s699 = scalar_lea.vmem %s15, %s698
        %p700 = pneg %p413
        %p701 = pneg %p410
        %p702 = scmp.lt.s32.totalorder %s32, 1
        %s703 = scalar_select %p702, %s32, 1
        %s704 = smul.addr %s703, 16
        %s705 = smul.addr %s704, 4
        %s706 = scalar_lea.vmem %s16, %s705
        %p707 = pneg %p439
        %p708 = pneg %p436
        %p709 = scmp.lt.s32.totalorder %s32, 1
        %s710 = scalar_select %p709, %s32, 1
        %s711 = scalar_lea.vmem %s17, %s710
        %p712 = pneg %p465
        %p713 = pneg %p462
        %p714 = pneg %p486
        %p715 = pneg %p483
        %p716 = scmp.lt.s32.totalorder %s32, 1
        %s717 = scalar_select %p716, %s32, 1
        %s718 = scalar_lea.vmem %s6, %s717
        %p719 = scmp.lt.s32.totalorder %s32, 1
        %s720 = scalar_select %p719, %s32, 1
        %s721 = scalar_lea.vmem %s7, %s720
        %p722 = scmp.lt.s32.totalorder %s32, 1
        %s723 = scalar_select %p722, %s32, 1
        %s724 = smul.addr %s723, 4
        %s725 = smul.addr %s724, 4
        %s726 = scalar_lea.vmem %s8, %s725
        %p727 = scmp.lt.s32.totalorder %s32, 1
        %s728 = scalar_select %p727, %s32, 1
        %s729 = scalar_lea.vmem %s9, %s728
        %p730 = scmp.lt.s32.totalorder %s32, 1
        %s731 = scalar_select %p730, %s32, 1
        %s732 = smul.addr %s731, 4
        %s733 = smul.addr %s732, 4
        %s734 = scalar_lea.vmem %s10, %s733
        %p735 = scmp.lt.s32.totalorder %s32, 1
        %s736 = scalar_select %p735, %s32, 1
        %s737 = scalar_lea.vmem %s11, %s736
        %p738 = scmp.lt.s32.totalorder %s32, 1
        %s739 = scalar_select %p738, %s32, 1
        %s740 = scalar_lea.vmem %s12, %s739
        %p741 = scmp.lt.s32.totalorder %s32, 1
        %s742 = scalar_select %p741, %s32, 1
        %s743 = scalar_lea.vmem %s13, %s742
        %p744 = scmp.lt.s32.totalorder %s32, 1
        %s745 = scalar_select %p744, %s32, 1
        %s746 = smul.addr %s745, 4
        %s747 = smul.addr %s746, 4
        %s748 = scalar_lea.vmem %s14, %s747
        %p749 = scmp.lt.s32.totalorder %s32, 1
        %s750 = scalar_select %p749, %s32, 1
        %s751 = scalar_lea.vmem %s15, %s750
        %p752 = scmp.lt.s32.totalorder %s32, 1
        %s753 = scalar_select %p752, %s32, 1
        %s754 = smul.addr %s753, 16
        %s755 = smul.addr %s754, 4
        %s756 = scalar_lea.vmem %s16, %s755
        %p757 = scmp.lt.s32.totalorder %s32, 1
        %s758 = scalar_select %p757, %s32, 1
        %s759 = scalar_lea.vmem %s17, %s758
        %p761 = scmp.eq.s32.totalorder %s32, 0
        // Predicated region
        $region101: #{tpu_custom_call.1} parent=91 // pred_check
          %p762 = pneg %p761
        $region102: #{tpu_custom_call.1} parent=91 // pred_check_branch
          %764 = sbr.rel (%p762) target = $region104
        $region103: #{tpu_custom_call.1} parent=91 // pred_region
          %v765 = vld [vmem:[%s0] sm:$0xff]
          %v766 = vld [vmem:[%s0 + $0x8] sm:$0xff]
          %v767 = vld [vmem:[%s0 + $0x10] sm:$0xff]
          %vm768 = vcmask 261120
          %769 = vst.msk [vmem:[#allocation2] sm:$0xff] %vm768, %v765
          %770 = vst.msk [vmem:[#allocation2 + $0x8] sm:$0xff] %vm768, %v766
          %771 = vst.msk [vmem:[#allocation2 + $0x10] sm:$0xff] %vm768, %v767
        $region104: #{tpu_custom_call.1} parent=91 // pred_fallthru
          _
        %v772 = vld [vmem:[#allocation2] sm:$0xff]
        %v773 = vld [vmem:[#allocation2 + $0x8] sm:$0xff]
        %v774 = vld [vmem:[#allocation2 + $0x10] sm:$0xff]
        %v775 = vld [vmem:[%s718] sm:$0x1]
        %v776 = vld [vmem:[%s721] sm:$0x1]
        %vm777 = vcmask 261120
        %v778 = vsel %vm777, %v772, 0.0
        %779 = vadd.xlane.f32.xlu0 %v778
        %v780 = vpop.xlane.xlu0 %779
        %v781 = vsel %vm777, %v773, 0.0
        %782 = vadd.xlane.f32.xlu0 %v781
        %v783 = vpop.xlane.xlu0 %782
        %v784 = vsel %vm777, %v774, 0.0
        %785 = vadd.xlane.f32.xlu0 %v784
        %v786 = vpop.xlane.xlu0 %785
        %v787 = vrcp.pop 32.0
        %v788 = vmul.f32 %v780, %v787
        %v789 = vmul.f32 %v783, %v787
        %v790 = vmul.f32 %v786, %v787
        %v791 = vsub.f32 %v772, %v788
        %v792 = vsub.f32 %v773, %v789
        %v793 = vsub.f32 %v774, %v790
        %v794 = vmul.f32 %v791, %v791
        %v795 = vmul.f32 %v792, %v792
        %v796 = vmul.f32 %v793, %v793
        %v797 = vsel %vm777, %v794, 0.0
        %798 = vadd.xlane.f32.xlu0 %v797
        %v799 = vpop.xlane.xlu0 %798
        %v800 = vsel %vm777, %v795, 0.0
        %801 = vadd.xlane.f32.xlu0 %v800
        %v802 = vpop.xlane.xlu0 %801
        %v803 = vsel %vm777, %v796, 0.0
        %804 = vadd.xlane.f32.xlu0 %v803
        %v805 = vpop.xlane.xlu0 %804
        %v806 = vmul.f32 %v799, %v787
        %v807 = vmul.f32 %v802, %v787
        %v808 = vmul.f32 %v805, %v787
        %v809 = vadd.f32 %v806, 1e-05
        %v810 = vadd.f32 %v807, 1e-05
        %v811 = vadd.f32 %v808, 1e-05
        %v812 = vrsqrt.pop %v809
        %v813 = vrsqrt.pop %v810
        %v814 = vrsqrt.pop %v811
        %v815 = vmul.f32 %v791, %v812
        %v816 = vmul.f32 %v792, %v813
        %v817 = vmul.f32 %v793, %v814
        %v819 = vlaneseq
        %v820 = vshrl.u32 %v819, 7
        %v821 = vsub.s32 0, %v820
        %v822 = vrot.slane %v775, %v821
        %v824 = vmul.f32 %v815, %v822
        %v825 = vmul.f32 %v816, %v822
        %v826 = vmul.f32 %v817, %v822
        %v828 = vlaneseq
        %v829 = vshrl.u32 %v828, 7
        %v830 = vsub.s32 0, %v829
        %v831 = vrot.slane %v776, %v830
        %v833 = vadd.f32 %v824, %v831
        %v834 = vadd.f32 %v825, %v831
        %v835 = vadd.f32 %v826, %v831
        %v836 = vld [vmem:[%s726] sm:$0xf]
        %v837 = vld [vmem:[%s726 + $0x4] sm:$0xf]
        %v838 = vld [vmem:[%s726 + $0x8] sm:$0xf]
        %v839 = vld [vmem:[%s726 + $0xc] sm:$0xf]
        %v840 = vld [vmem:[%s729] sm:$0x1]
        %v841 = vpack.c.bf16 %v834, %v833
        %v842 = vpack.c.bf16 %v835, %v835
        %v844 = vlaneseq
        %v845 = vshrl.u32 %v844, 7
        %v846 = vsub.s32 0, %v845
        %v847 = vrot.slane %v840, %v846
        %v853 = vunpack.c.l.b16 %v836
        %v854 = vunpack.c.l.b16 %v837
        %v855 = vunpack.c.l.b16 %v838
        %v856 = vunpack.c.l.b16 %v839
        %v857 = vpack.c.b16 %v854, %v853
        %v858 = vpack.c.b16 %v856, %v855
        %v862 = vsel %vm777, %v841, 0
        %v865 = vsel %vm777, %v842, 0
        %867 = vmatprep.subr.bf16.mxu0 0
        %868 = vmatpush1.bf16.msra.mxu0 0
        %869 = vmatprep.subr.bf16.mxu0 0
        %870 = vmatpush1.bf16.msra.mxu0 0
        %871 = vmatprep.subr.bf16.mxu0 0
        %872 = vmatpush1.bf16.msra.mxu0 0
        %873 = vmatprep.subr.bf16.mxu0 0
        %874 = vmatpush1.bf16.msra.mxu0 0
        %875 = vmatprep.subr.bf16.mxu0 0
        %876 = vmatpush1.bf16.msra.mxu0 0
        %877 = vmatprep.subr.bf16.mxu0 0
        %878 = vmatpush1.bf16.msra.mxu0 0
        %879 = vmatprep.subr.bf16.mxu0 0
        %880 = vmatpush1.bf16.msra.mxu0 %v858
        %881 = vmatprep.subr.bf16.mxu0 0
        %882 = vmatpush1.bf16.msra.mxu0 %v857
        %883 = vmatprep.subr.bf16.mxu0 0
        %884 = vmatpush2.bf16.msra.mxu0 0
        %885 = vmatprep.subr.bf16.mxu0 0
        %886 = vmatpush2.bf16.msra.mxu0 0
        %887 = vmatprep.subr.bf16.mxu0 0
        %888 = vmatpush2.bf16.msra.mxu0 0
        %889 = vmatprep.subr.bf16.mxu0 0
        %890 = vmatpush2.bf16.msra.mxu0 0
        %891 = vmatprep.subr.bf16.mxu0 0
        %892 = vmatpush2.bf16.msra.mxu0 0
        %893 = vmatprep.subr.bf16.mxu0 0
        %894 = vmatpush2.bf16.msra.mxu0 0
        %895 = vmatprep.subr.bf16.mxu0 0
        %896 = vmatpush2.bf16.msra.mxu0 0
        %897 = vmatprep.subr.bf16.mxu0 0
        %898 = vmatpush2.bf16.msra.mxu0 0
        %899 = vmatprep.mubr.bf16.mxu0 0
        %900 = vmatmul.mubr.bf16.gmra.mxu0 %v862
        %v901 = vpop.f32.mrf.mxu0
        %v902 = vadd.f32 %v847, %v901
        %v903 = vpop.f32.mrf.mxu0
        %v904 = vpop.f32.mrf.mxu0
        %v905 = vadd.f32 %v847, %v904
        %v906 = vpop.f32.mrf.mxu0
        %907 = vmatprep.mubr.bf16.mxu0 0
        %908 = vmatmul.mubr.bf16.gmra.mxu0 %v865
        %v909 = vpop.f32.mrf.mxu0
        %v910 = vadd.f32 %v847, %v909
        %v911 = vpop.f32.mrf.mxu0
        %v912 = vpop.f32.mrf.mxu0
        %v913 = vpop.f32.mrf.mxu0
        %914 = vdwg.mxu0
        %v915 = vmul.f32 %v902, 0.35355338
        %v916 = vmul.f32 %v905, 0.35355338
        %v917 = vmul.f32 %v910, 0.35355338
        %921 = vrot.lane.b32.xlu0 %v915, 120
        %v922 = vpop.permute.xlu0 %921
        %923 = vrot.lane.b32.xlu0 %v916, 120
        %v924 = vpop.permute.xlu0 %923
        %925 = vrot.lane.b32.xlu0 %v917, 120
        %v926 = vpop.permute.xlu0 %925
        %930 = vrot.lane.b32.xlu0 %v915, 112
        %v931 = vpop.permute.xlu0 %930
        %932 = vrot.lane.b32.xlu0 %v916, 112
        %v933 = vpop.permute.xlu0 %932
        %934 = vrot.lane.b32.xlu0 %v917, 112
        %v935 = vpop.permute.xlu0 %934
        %939 = vrot.lane.b32.xlu0 %v915, 104
        %v940 = vpop.permute.xlu0 %939
        %941 = vrot.lane.b32.xlu0 %v916, 104
        %v942 = vpop.permute.xlu0 %941
        %943 = vrot.lane.b32.xlu0 %v917, 104
        %v944 = vpop.permute.xlu0 %943
        %951 = vrot.lane.b32.xlu0 %v902, 120
        %v952 = vpop.permute.xlu0 %951
        %953 = vrot.lane.b32.xlu0 %v905, 120
        %v954 = vpop.permute.xlu0 %953
        %955 = vrot.lane.b32.xlu0 %v910, 120
        %v956 = vpop.permute.xlu0 %955
        %960 = vrot.lane.b32.xlu0 %v902, 112
        %v961 = vpop.permute.xlu0 %960
        %962 = vrot.lane.b32.xlu0 %v905, 112
        %v963 = vpop.permute.xlu0 %962
        %964 = vrot.lane.b32.xlu0 %v910, 112
        %v965 = vpop.permute.xlu0 %964
        %969 = vrot.lane.b32.xlu0 %v902, 104
        %v970 = vpop.permute.xlu0 %969
        %971 = vrot.lane.b32.xlu0 %v905, 104
        %v972 = vpop.permute.xlu0 %971
        %973 = vrot.lane.b32.xlu0 %v910, 104
        %v974 = vpop.permute.xlu0 %973
        %v978 = vpack.c.bf16 %v916, %v915
        %v979 = vpack.c.bf16 %v917, %v917
        %v980 = vpack.c.bf16 %v924, %v922
        %v981 = vpack.c.bf16 %v926, %v926
        %v982 = vpack.c.bf16 %v933, %v931
        %v983 = vpack.c.bf16 %v935, %v935
        %v984 = vpack.c.bf16 %v942, %v940
        %v985 = vpack.c.bf16 %v944, %v944
        %v986 = vpack.c.bf16 %v905, %v902
        %v987 = vpack.c.bf16 %v910, %v910
        %v988 = vpack.c.bf16 %v954, %v952
        %v989 = vpack.c.bf16 %v956, %v956
        %v990 = vpack.c.bf16 %v963, %v961
        %v991 = vpack.c.bf16 %v965, %v965
        %v992 = vpack.c.bf16 %v972, %v970
        %v993 = vpack.c.bf16 %v974, %v974
        %v994 = vld [vmem:[%s1] sm:$0xff]
        %v995 = vld [vmem:[%s1 + $0x8] sm:$0xff]
        %v996 = vld [vmem:[%s1 + $0x10] sm:$0xff]
        %999 = vrot.lane.b32.xlu0 %v986, 96
        %v1000 = vpop.permute.xlu0 %999
        %1001 = vrot.lane.b32.xlu0 %v987, 96
        %v1002 = vpop.permute.xlu0 %1001
        %vm1003 = vcmask 64512
        %v1005 = vsel %vm1003, %v978, 0
        %v1008 = vsel %vm1003, %v979, 0
        %v1011 = vsel %vm1003, %v1000, 0
        %v1014 = vsel %vm1003, %v1002, 0
        %1016 = vmatprep.subr.bf16.mxu0 0
        %1017 = vmatpush1.bf16.xpose.msra.mxu0 0
        %1018 = vmatprep.subr.bf16.mxu0 0
        %1019 = vmatpush1.bf16.xpose.msra.mxu0 0
        %1020 = vmatprep.subr.bf16.mxu0 0
        %1021 = vmatpush1.bf16.xpose.msra.mxu0 0
        %1022 = vmatprep.subr.bf16.mxu0 0
        %1023 = vmatpush1.bf16.xpose.msra.mxu0 0
        %1024 = vmatprep.subr.bf16.mxu0 0
        %1025 = vmatpush1.bf16.xpose.msra.mxu0 0
        %1026 = vmatprep.subr.bf16.mxu0 0
        %1027 = vmatpush1.bf16.xpose.msra.mxu0 0
        %1028 = vmatprep.subr.bf16.mxu0 0
        %1029 = vmatpush1.bf16.xpose.msra.mxu0 %v1014
        %1030 = vmatprep.subr.bf16.mxu0 0
        %1031 = vmatpush1.bf16.xpose.msra.mxu0 %v1011
        %1032 = vmatprep.subr.bf16.mxu0 0
        %1033 = vmatpush2.bf16.xpose.msra.mxu0 0
        %1034 = vmatprep.subr.bf16.mxu0 0
        %1035 = vmatpush2.bf16.xpose.msra.mxu0 0
        %1036 = vmatprep.subr.bf16.mxu0 0
        %1037 = vmatpush2.bf16.xpose.msra.mxu0 0
        %1038 = vmatprep.subr.bf16.mxu0 0
        %1039 = vmatpush2.bf16.xpose.msra.mxu0 0
        %1040 = vmatprep.subr.bf16.mxu0 0
        %1041 = vmatpush2.bf16.xpose.msra.mxu0 0
        %1042 = vmatprep.subr.bf16.mxu0 0
        %1043 = vmatpush2.bf16.xpose.msra.mxu0 0
        %1044 = vmatprep.subr.bf16.mxu0 0
        %1045 = vmatpush2.bf16.xpose.msra.mxu0 0
        %1046 = vmatprep.subr.bf16.mxu0 0
        %1047 = vmatpush2.bf16.xpose.msra.mxu0 0
        %1048 = vmatprep.mubr.bf16.mxu0 0
        %1049 = vmatmul.mubr.bf16.gmra.mxu0 %v1005
        %v1050 = vpop.f32.mrf.mxu0
        %v1051 = vadd.f32 %v994, %v1050
        %v1052 = vpop.f32.mrf.mxu0
        %v1053 = vpop.f32.mrf.mxu0
        %v1054 = vadd.f32 %v995, %v1053
        %v1055 = vpop.f32.mrf.mxu0
        %1056 = vmatprep.mubr.bf16.mxu0 0
        %1057 = vmatmul.mubr.bf16.gmra.mxu0 %v1008
        %v1058 = vpop.f32.mrf.mxu0
        %v1059 = vadd.f32 %v996, %v1058
        %v1060 = vpop.f32.mrf.mxu0
        %v1061 = vpop.f32.mrf.mxu0
        %v1062 = vpop.f32.mrf.mxu0
        %1063 = vdwg.mxu0
        %1066 = vrot.lane.b32.xlu0 %v988, 96
        %v1067 = vpop.permute.xlu0 %1066
        %1068 = vrot.lane.b32.xlu0 %v989, 96
        %v1069 = vpop.permute.xlu0 %1068
        %v1071 = vsel %vm1003, %v980, 0
        %v1074 = vsel %vm1003, %v981, 0
        %v1077 = vsel %vm1003, %v1067, 0
        %v1080 = vsel %vm1003, %v1069, 0
        %1082 = vmatprep.subr.bf16.mxu0 0
        %1083 = vmatpush1.bf16.xpose.msra.mxu0 0
        %1084 = vmatprep.subr.bf16.mxu0 0
        %1085 = vmatpush1.bf16.xpose.msra.mxu0 0
        %1086 = vmatprep.subr.bf16.mxu0 0
        %1087 = vmatpush1.bf16.xpose.msra.mxu0 0
        %1088 = vmatprep.subr.bf16.mxu0 0
        %1089 = vmatpush1.bf16.xpose.msra.mxu0 0
        %1090 = vmatprep.subr.bf16.mxu0 0
        %1091 = vmatpush1.bf16.xpose.msra.mxu0 0
        %1092 = vmatprep.subr.bf16.mxu0 0
        %1093 = vmatpush1.bf16.xpose.msra.mxu0 0
        %1094 = vmatprep.subr.bf16.mxu0 0
        %1095 = vmatpush1.bf16.xpose.msra.mxu0 %v1080
        %1096 = vmatprep.subr.bf16.mxu0 0
        %1097 = vmatpush1.bf16.xpose.msra.mxu0 %v1077
        %1098 = vmatprep.subr.bf16.mxu0 0
        %1099 = vmatpush2.bf16.xpose.msra.mxu0 0
        %1100 = vmatprep.subr.bf16.mxu0 0
        %1101 = vmatpush2.bf16.xpose.msra.mxu0 0
        %1102 = vmatprep.subr.bf16.mxu0 0
        %1103 = vmatpush2.bf16.xpose.msra.mxu0 0
        %1104 = vmatprep.subr.bf16.mxu0 0
        %1105 = vmatpush2.bf16.xpose.msra.mxu0 0
        %1106 = vmatprep.subr.bf16.mxu0 0
        %1107 = vmatpush2.bf16.xpose.msra.mxu0 0
        %1108 = vmatprep.subr.bf16.mxu0 0
        %1109 = vmatpush2.bf16.xpose.msra.mxu0 0
        %1110 = vmatprep.subr.bf16.mxu0 0
        %1111 = vmatpush2.bf16.xpose.msra.mxu0 0
        %1112 = vmatprep.subr.bf16.mxu0 0
        %1113 = vmatpush2.bf16.xpose.msra.mxu0 0
        %1114 = vmatprep.mubr.bf16.mxu0 0
        %1115 = vmatmul.mubr.bf16.gmra.mxu0 %v1071
        %v1116 = vpop.f32.mrf.mxu0
        %v1117 = vadd.f32 %v994, %v1116
        %v1118 = vpop.f32.mrf.mxu0
        %v1119 = vpop.f32.mrf.mxu0
        %v1120 = vadd.f32 %v995, %v1119
        %v1121 = vpop.f32.mrf.mxu0
        %1122 = vmatprep.mubr.bf16.mxu0 0
        %1123 = vmatmul.mubr.bf16.gmra.mxu0 %v1074
        %v1124 = vpop.f32.mrf.mxu0
        %v1125 = vadd.f32 %v996, %v1124
        %v1126 = vpop.f32.mrf.mxu0
        %v1127 = vpop.f32.mrf.mxu0
        %v1128 = vpop.f32.mrf.mxu0
        %1129 = vdwg.mxu0
        %1132 = vrot.lane.b32.xlu0 %v990, 96
        %v1133 = vpop.permute.xlu0 %1132
        %1134 = vrot.lane.b32.xlu0 %v991, 96
        %v1135 = vpop.permute.xlu0 %1134
        %v1137 = vsel %vm1003, %v982, 0
        %v1140 = vsel %vm1003, %v983, 0
        %v1143 = vsel %vm1003, %v1133, 0
        %v1146 = vsel %vm1003, %v1135, 0
        %1148 = vmatprep.subr.bf16.mxu0 0
        %1149 = vmatpush1.bf16.xpose.msra.mxu0 0
        %1150 = vmatprep.subr.bf16.mxu0 0
        %1151 = vmatpush1.bf16.xpose.msra.mxu0 0
        %1152 = vmatprep.subr.bf16.mxu0 0
        %1153 = vmatpush1.bf16.xpose.msra.mxu0 0
        %1154 = vmatprep.subr.bf16.mxu0 0
        %1155 = vmatpush1.bf16.xpose.msra.mxu0 0
        %1156 = vmatprep.subr.bf16.mxu0 0
        %1157 = vmatpush1.bf16.xpose.msra.mxu0 0
        %1158 = vmatprep.subr.bf16.mxu0 0
        %1159 = vmatpush1.bf16.xpose.msra.mxu0 0
        %1160 = vmatprep.subr.bf16.mxu0 0
        %1161 = vmatpush1.bf16.xpose.msra.mxu0 %v1146
        %1162 = vmatprep.subr.bf16.mxu0 0
        %1163 = vmatpush1.bf16.xpose.msra.mxu0 %v1143
        %1164 = vmatprep.subr.bf16.mxu0 0
        %1165 = vmatpush2.bf16.xpose.msra.mxu0 0
        %1166 = vmatprep.subr.bf16.mxu0 0
        %1167 = vmatpush2.bf16.xpose.msra.mxu0 0
        %1168 = vmatprep.subr.bf16.mxu0 0
        %1169 = vmatpush2.bf16.xpose.msra.mxu0 0
        %1170 = vmatprep.subr.bf16.mxu0 0
        %1171 = vmatpush2.bf16.xpose.msra.mxu0 0
        %1172 = vmatprep.subr.bf16.mxu0 0
        %1173 = vmatpush2.bf16.xpose.msra.mxu0 0
        %1174 = vmatprep.subr.bf16.mxu0 0
        %1175 = vmatpush2.bf16.xpose.msra.mxu0 0
        %1176 = vmatprep.subr.bf16.mxu0 0
        %1177 = vmatpush2.bf16.xpose.msra.mxu0 0
        %1178 = vmatprep.subr.bf16.mxu0 0
        %1179 = vmatpush2.bf16.xpose.msra.mxu0 0
        %1180 = vmatprep.mubr.bf16.mxu0 0
        %1181 = vmatmul.mubr.bf16.gmra.mxu0 %v1137
        %v1182 = vpop.f32.mrf.mxu0
        %v1183 = vadd.f32 %v994, %v1182
        %v1184 = vpop.f32.mrf.mxu0
        %v1185 = vpop.f32.mrf.mxu0
        %v1186 = vadd.f32 %v995, %v1185
        %v1187 = vpop.f32.mrf.mxu0
        %1188 = vmatprep.mubr.bf16.mxu0 0
        %1189 = vmatmul.mubr.bf16.gmra.mxu0 %v1140
        %v1190 = vpop.f32.mrf.mxu0
        %v1191 = vadd.f32 %v996, %v1190
        %v1192 = vpop.f32.mrf.mxu0
        %v1193 = vpop.f32.mrf.mxu0
        %v1194 = vpop.f32.mrf.mxu0
        %1195 = vdwg.mxu0
        %1198 = vrot.lane.b32.xlu0 %v992, 96
        %v1199 = vpop.permute.xlu0 %1198
        %1200 = vrot.lane.b32.xlu0 %v993, 96
        %v1201 = vpop.permute.xlu0 %1200
        %v1203 = vsel %vm1003, %v984, 0
        %v1206 = vsel %vm1003, %v985, 0
        %v1209 = vsel %vm1003, %v1199, 0
        %v1212 = vsel %vm1003, %v1201, 0
        %1214 = vmatprep.subr.bf16.mxu0 0
        %1215 = vmatpush1.bf16.xpose.msra.mxu0 0
        %1216 = vmatprep.subr.bf16.mxu0 0
        %1217 = vmatpush1.bf16.xpose.msra.mxu0 0
        %1218 = vmatprep.subr.bf16.mxu0 0
        %1219 = vmatpush1.bf16.xpose.msra.mxu0 0
        %1220 = vmatprep.subr.bf16.mxu0 0
        %1221 = vmatpush1.bf16.xpose.msra.mxu0 0
        %1222 = vmatprep.subr.bf16.mxu0 0
        %1223 = vmatpush1.bf16.xpose.msra.mxu0 0
        %1224 = vmatprep.subr.bf16.mxu0 0
        %1225 = vmatpush1.bf16.xpose.msra.mxu0 0
        %1226 = vmatprep.subr.bf16.mxu0 0
        %1227 = vmatpush1.bf16.xpose.msra.mxu0 %v1212
        %1228 = vmatprep.subr.bf16.mxu0 0
        %1229 = vmatpush1.bf16.xpose.msra.mxu0 %v1209
        %1230 = vmatprep.subr.bf16.mxu0 0
        %1231 = vmatpush2.bf16.xpose.msra.mxu0 0
        %1232 = vmatprep.subr.bf16.mxu0 0
        %1233 = vmatpush2.bf16.xpose.msra.mxu0 0
        %1234 = vmatprep.subr.bf16.mxu0 0
        %1235 = vmatpush2.bf16.xpose.msra.mxu0 0
        %1236 = vmatprep.subr.bf16.mxu0 0
        %1237 = vmatpush2.bf16.xpose.msra.mxu0 0
        %1238 = vmatprep.subr.bf16.mxu0 0
        %1239 = vmatpush2.bf16.xpose.msra.mxu0 0
        %1240 = vmatprep.subr.bf16.mxu0 0
        %1241 = vmatpush2.bf16.xpose.msra.mxu0 0
        %1242 = vmatprep.subr.bf16.mxu0 0
        %1243 = vmatpush2.bf16.xpose.msra.mxu0 0
        %1244 = vmatprep.subr.bf16.mxu0 0
        %1245 = vmatpush2.bf16.xpose.msra.mxu0 0
        %1246 = vmatprep.mubr.bf16.mxu0 0
        %1247 = vmatmul.mubr.bf16.gmra.mxu0 %v1203
        %v1248 = vpop.f32.mrf.mxu0
        %v1249 = vadd.f32 %v994, %v1248
        %v1250 = vpop.f32.mrf.mxu0
        %v1251 = vpop.f32.mrf.mxu0
        %v1252 = vadd.f32 %v995, %v1251
        %v1253 = vpop.f32.mrf.mxu0
        %1254 = vmatprep.mubr.bf16.mxu0 0
        %1255 = vmatmul.mubr.bf16.gmra.mxu0 %v1206
        %v1256 = vpop.f32.mrf.mxu0
        %v1257 = vadd.f32 %v996, %v1256
        %v1258 = vpop.f32.mrf.mxu0
        %v1259 = vpop.f32.mrf.mxu0
        %v1260 = vpop.f32.mrf.mxu0
        %1261 = vdwg.mxu0
        %vm1262 = vcmask 195584
        %v1263 = vsel %vm1262, %v1051, -inf
        %1264 = vmax.xlane.f32.xlu0 %v1263
        %v1265 = vpop.xlane.xlu0 %1264
        %v1266 = vsel %vm1262, %v1054, -inf
        %1267 = vmax.xlane.f32.xlu0 %v1266
        %v1268 = vpop.xlane.xlu0 %1267
        %v1269 = vsel %vm1262, %v1059, -inf
        %1270 = vmax.xlane.f32.xlu0 %v1269
        %v1271 = vpop.xlane.xlu0 %1270
        %v1272 = vsel %vm1262, %v1117, -inf
        %1273 = vmax.xlane.f32.xlu0 %v1272
        %v1274 = vpop.xlane.xlu0 %1273
        %v1275 = vsel %vm1262, %v1120, -inf
        %1276 = vmax.xlane.f32.xlu0 %v1275
        %v1277 = vpop.xlane.xlu0 %1276
        %v1278 = vsel %vm1262, %v1125, -inf
        %1279 = vmax.xlane.f32.xlu0 %v1278
        %v1280 = vpop.xlane.xlu0 %1279
        %v1281 = vsel %vm1262, %v1183, -inf
        %1282 = vmax.xlane.f32.xlu0 %v1281
        %v1283 = vpop.xlane.xlu0 %1282
        %v1284 = vsel %vm1262, %v1186, -inf
        %1285 = vmax.xlane.f32.xlu0 %v1284
        %v1286 = vpop.xlane.xlu0 %1285
        %v1287 = vsel %vm1262, %v1191, -inf
        %1288 = vmax.xlane.f32.xlu0 %v1287
        %v1289 = vpop.xlane.xlu0 %1288
        %v1290 = vsel %vm1262, %v1249, -inf
        %1291 = vmax.xlane.f32.xlu0 %v1290
        %v1292 = vpop.xlane.xlu0 %1291
        %v1293 = vsel %vm1262, %v1252, -inf
        %1294 = vmax.xlane.f32.xlu0 %v1293
        %v1295 = vpop.xlane.xlu0 %1294
        %v1296 = vsel %vm1262, %v1257, -inf
        %1297 = vmax.xlane.f32.xlu0 %v1296
        %v1298 = vpop.xlane.xlu0 %1297
        %v1299 = vsub.f32 %v1051, %v1265
        %v1300 = vsub.f32 %v1054, %v1268
        %v1301 = vsub.f32 %v1059, %v1271
        %v1302 = vsub.f32 %v1117, %v1274
        %v1303 = vsub.f32 %v1120, %v1277
        %v1304 = vsub.f32 %v1125, %v1280
        %v1305 = vsub.f32 %v1183, %v1283
        %v1306 = vsub.f32 %v1186, %v1286
        %v1307 = vsub.f32 %v1191, %v1289
        %v1308 = vsub.f32 %v1249, %v1292
        %v1309 = vsub.f32 %v1252, %v1295
        %v1310 = vsub.f32 %v1257, %v1298
        %v1311 = vmul.f32 %v1299, 1.442695
        %v1312 = vpow.pop %v1311
        %v1313 = vmul.f32 %v1300, 1.442695
        %v1314 = vpow.pop %v1313
        %v1315 = vmul.f32 %v1301, 1.442695
        %v1316 = vpow.pop %v1315
        %v1317 = vmul.f32 %v1302, 1.442695
        %v1318 = vpow.pop %v1317
        %v1319 = vmul.f32 %v1303, 1.442695
        %v1320 = vpow.pop %v1319
        %v1321 = vmul.f32 %v1304, 1.442695
        %v1322 = vpow.pop %v1321
        %v1323 = vmul.f32 %v1305, 1.442695
        %v1324 = vpow.pop %v1323
        %v1325 = vmul.f32 %v1306, 1.442695
        %v1326 = vpow.pop %v1325
        %v1327 = vmul.f32 %v1307, 1.442695
        %v1328 = vpow.pop %v1327
        %v1329 = vmul.f32 %v1308, 1.442695
        %v1330 = vpow.pop %v1329
        %v1331 = vmul.f32 %v1309, 1.442695
        %v1332 = vpow.pop %v1331
        %v1333 = vmul.f32 %v1310, 1.442695
        %v1334 = vpow.pop %v1333
        %v1335 = vsel %vm1262, %v1312, 0.0
        %1336 = vadd.xlane.f32.xlu0 %v1335
        %v1337 = vpop.xlane.xlu0 %1336
        %v1338 = vsel %vm1262, %v1314, 0.0
        %1339 = vadd.xlane.f32.xlu0 %v1338
        %v1340 = vpop.xlane.xlu0 %1339
        %v1341 = vsel %vm1262, %v1316, 0.0
        %1342 = vadd.xlane.f32.xlu0 %v1341
        %v1343 = vpop.xlane.xlu0 %1342
        %v1344 = vsel %vm1262, %v1318, 0.0
        %1345 = vadd.xlane.f32.xlu0 %v1344
        %v1346 = vpop.xlane.xlu0 %1345
        %v1347 = vsel %vm1262, %v1320, 0.0
        %1348 = vadd.xlane.f32.xlu0 %v1347
        %v1349 = vpop.xlane.xlu0 %1348
        %v1350 = vsel %vm1262, %v1322, 0.0
        %1351 = vadd.xlane.f32.xlu0 %v1350
        %v1352 = vpop.xlane.xlu0 %1351
        %v1353 = vsel %vm1262, %v1324, 0.0
        %1354 = vadd.xlane.f32.xlu0 %v1353
        %v1355 = vpop.xlane.xlu0 %1354
        %v1356 = vsel %vm1262, %v1326, 0.0
        %1357 = vadd.xlane.f32.xlu0 %v1356
        %v1358 = vpop.xlane.xlu0 %1357
        %v1359 = vsel %vm1262, %v1328, 0.0
        %1360 = vadd.xlane.f32.xlu0 %v1359
        %v1361 = vpop.xlane.xlu0 %1360
        %v1362 = vsel %vm1262, %v1330, 0.0
        %1363 = vadd.xlane.f32.xlu0 %v1362
        %v1364 = vpop.xlane.xlu0 %1363
        %v1365 = vsel %vm1262, %v1332, 0.0
        %1366 = vadd.xlane.f32.xlu0 %v1365
        %v1367 = vpop.xlane.xlu0 %1366
        %v1368 = vsel %vm1262, %v1334, 0.0
        %1369 = vadd.xlane.f32.xlu0 %v1368
        %v1370 = vpop.xlane.xlu0 %1369
        %v1371 = vrcp.pop %v1337
        %v1372 = vrcp.pop %v1340
        %v1373 = vrcp.pop %v1343
        %v1374 = vrcp.pop %v1346
        %v1375 = vrcp.pop %v1349
        %v1376 = vrcp.pop %v1352
        %v1377 = vrcp.pop %v1355
        %v1378 = vrcp.pop %v1358
        %v1379 = vrcp.pop %v1361
        %v1380 = vrcp.pop %v1364
        %v1381 = vrcp.pop %v1367
        %v1382 = vrcp.pop %v1370
        %v1383 = vmul.f32 %v1312, %v1371
        %v1384 = vmul.f32 %v1314, %v1372
        %v1385 = vmul.f32 %v1316, %v1373
        %v1386 = vmul.f32 %v1318, %v1374
        %v1387 = vmul.f32 %v1320, %v1375
        %v1388 = vmul.f32 %v1322, %v1376
        %v1389 = vmul.f32 %v1324, %v1377
        %v1390 = vmul.f32 %v1326, %v1378
        %v1391 = vmul.f32 %v1328, %v1379
        %v1392 = vmul.f32 %v1330, %v1380
        %v1393 = vmul.f32 %v1332, %v1381
        %v1394 = vmul.f32 %v1334, %v1382
        %v1395 = vpack.c.bf16 %v1384, %v1383
        %v1396 = vpack.c.bf16 %v1385, %v1385
        %v1397 = vpack.c.bf16 %v1387, %v1386
        %v1398 = vpack.c.bf16 %v1388, %v1388
        %v1399 = vpack.c.bf16 %v1390, %v1389
        %v1400 = vpack.c.bf16 %v1391, %v1391
        %v1401 = vpack.c.bf16 %v1393, %v1392
        %v1402 = vpack.c.bf16 %v1394, %v1394
        %1403 = vrot.lane.b32.xlu0 %v986, 64
        %v1404 = vpop.permute.xlu0 %1403
        %1405 = vrot.lane.b32.xlu0 %v987, 64
        %v1406 = vpop.permute.xlu0 %1405
        %v1409 = vsel %vm1262, %v1395, 0
        %v1412 = vsel %vm1262, %v1396, 0
        %vm1414 = vcmask 1043456
        %v1416 = vsel %vm1414, %v1406, 0
        %1418 = vmatprep.subr.bf16.mxu0 0
        %1419 = vmatpush1.bf16.msra.mxu0 0
        %1420 = vmatprep.subr.bf16.mxu0 0
        %1421 = vmatpush1.bf16.msra.mxu0 0
        %1422 = vmatprep.subr.bf16.mxu0 0
        %1423 = vmatpush1.bf16.msra.mxu0 0
        %1424 = vmatprep.subr.bf16.mxu0 0
        %1425 = vmatpush1.bf16.msra.mxu0 0
        %1426 = vmatprep.subr.bf16.mxu0 0
        %1427 = vmatpush1.bf16.msra.mxu0 0
        %1428 = vmatprep.subr.bf16.mxu0 0
        %1429 = vmatpush1.bf16.msra.mxu0 0
        %1430 = vmatprep.subr.bf16.mxu0 0
        %1431 = vmatpush1.bf16.msra.mxu0 %v1416
        %1432 = vmatprep.subr.bf16.mxu0 0
        %1433 = vmatpush1.bf16.msra.mxu0 %v1404
        %1434 = vmatprep.subr.bf16.mxu0 0
        %1435 = vmatpush2.bf16.msra.mxu0 0
        %1436 = vmatprep.subr.bf16.mxu0 0
        %1437 = vmatpush2.bf16.msra.mxu0 0
        %1438 = vmatprep.subr.bf16.mxu0 0
        %1439 = vmatpush2.bf16.msra.mxu0 0
        %1440 = vmatprep.subr.bf16.mxu0 0
        %1441 = vmatpush2.bf16.msra.mxu0 0
        %1442 = vmatprep.subr.bf16.mxu0 0
        %1443 = vmatpush2.bf16.msra.mxu0 0
        %1444 = vmatprep.subr.bf16.mxu0 0
        %1445 = vmatpush2.bf16.msra.mxu0 0
        %1446 = vmatprep.subr.bf16.mxu0 0
        %1447 = vmatpush2.bf16.msra.mxu0 0
        %1448 = vmatprep.subr.bf16.mxu0 0
        %1449 = vmatpush2.bf16.msra.mxu0 0
        %1450 = vmatprep.mubr.bf16.mxu0 0
        %1451 = vmatmul.mubr.bf16.gmra.mxu0 %v1409
        %v1452 = vpop.f32.mrf.mxu0
        %v1453 = vadd.f32 0.0, %v1452
        %v1454 = vpop.f32.mrf.mxu0
        %v1455 = vpop.f32.mrf.mxu0
        %v1456 = vadd.f32 0.0, %v1455
        %v1457 = vpop.f32.mrf.mxu0
        %1458 = vmatprep.mubr.bf16.mxu0 0
        %1459 = vmatmul.mubr.bf16.gmra.mxu0 %v1412
        %v1460 = vpop.f32.mrf.mxu0
        %v1461 = vadd.f32 0.0, %v1460
        %v1462 = vpop.f32.mrf.mxu0
        %v1463 = vpop.f32.mrf.mxu0
        %v1464 = vpop.f32.mrf.mxu0
        %1465 = vdwg.mxu0
        %1466 = vrot.lane.b32.xlu0 %v988, 64
        %v1467 = vpop.permute.xlu0 %1466
        %1468 = vrot.lane.b32.xlu0 %v989, 64
        %v1469 = vpop.permute.xlu0 %1468
        %v1472 = vsel %vm1262, %v1397, 0
        %v1475 = vsel %vm1262, %v1398, 0
        %v1478 = vsel %vm1414, %v1469, 0
        %1480 = vmatprep.subr.bf16.mxu0 0
        %1481 = vmatpush1.bf16.msra.mxu0 0
        %1482 = vmatprep.subr.bf16.mxu0 0
        %1483 = vmatpush1.bf16.msra.mxu0 0
        %1484 = vmatprep.subr.bf16.mxu0 0
        %1485 = vmatpush1.bf16.msra.mxu0 0
        %1486 = vmatprep.subr.bf16.mxu0 0
        %1487 = vmatpush1.bf16.msra.mxu0 0
        %1488 = vmatprep.subr.bf16.mxu0 0
        %1489 = vmatpush1.bf16.msra.mxu0 0
        %1490 = vmatprep.subr.bf16.mxu0 0
        %1491 = vmatpush1.bf16.msra.mxu0 0
        %1492 = vmatprep.subr.bf16.mxu0 0
        %1493 = vmatpush1.bf16.msra.mxu0 %v1478
        %1494 = vmatprep.subr.bf16.mxu0 0
        %1495 = vmatpush1.bf16.msra.mxu0 %v1467
        %1496 = vmatprep.subr.bf16.mxu0 0
        %1497 = vmatpush2.bf16.msra.mxu0 0
        %1498 = vmatprep.subr.bf16.mxu0 0
        %1499 = vmatpush2.bf16.msra.mxu0 0
        %1500 = vmatprep.subr.bf16.mxu0 0
        %1501 = vmatpush2.bf16.msra.mxu0 0
        %1502 = vmatprep.subr.bf16.mxu0 0
        %1503 = vmatpush2.bf16.msra.mxu0 0
        %1504 = vmatprep.subr.bf16.mxu0 0
        %1505 = vmatpush2.bf16.msra.mxu0 0
        %1506 = vmatprep.subr.bf16.mxu0 0
        %1507 = vmatpush2.bf16.msra.mxu0 0
        %1508 = vmatprep.subr.bf16.mxu0 0
        %1509 = vmatpush2.bf16.msra.mxu0 0
        %1510 = vmatprep.subr.bf16.mxu0 0
        %1511 = vmatpush2.bf16.msra.mxu0 0
        %1512 = vmatprep.mubr.bf16.mxu0 0
        %1513 = vmatmul.mubr.bf16.gmra.mxu0 %v1472
        %v1514 = vpop.f32.mrf.mxu0
        %v1515 = vadd.f32 0.0, %v1514
        %v1516 = vpop.f32.mrf.mxu0
        %v1517 = vpop.f32.mrf.mxu0
        %v1518 = vadd.f32 0.0, %v1517
        %v1519 = vpop.f32.mrf.mxu0
        %1520 = vmatprep.mubr.bf16.mxu0 0
        %1521 = vmatmul.mubr.bf16.gmra.mxu0 %v1475
        %v1522 = vpop.f32.mrf.mxu0
        %v1523 = vadd.f32 0.0, %v1522
        %v1524 = vpop.f32.mrf.mxu0
        %v1525 = vpop.f32.mrf.mxu0
        %v1526 = vpop.f32.mrf.mxu0
        %1527 = vdwg.mxu0
        %1528 = vrot.lane.b32.xlu0 %v990, 64
        %v1529 = vpop.permute.xlu0 %1528
        %1530 = vrot.lane.b32.xlu0 %v991, 64
        %v1531 = vpop.permute.xlu0 %1530
        %v1534 = vsel %vm1262, %v1399, 0
        %v1537 = vsel %vm1262, %v1400, 0
        %v1540 = vsel %vm1414, %v1531, 0
        %1542 = vmatprep.subr.bf16.mxu0 0
        %1543 = vmatpush1.bf16.msra.mxu0 0
        %1544 = vmatprep.subr.bf16.mxu0 0
        %1545 = vmatpush1.bf16.msra.mxu0 0
        %1546 = vmatprep.subr.bf16.mxu0 0
        %1547 = vmatpush1.bf16.msra.mxu0 0
        %1548 = vmatprep.subr.bf16.mxu0 0
        %1549 = vmatpush1.bf16.msra.mxu0 0
        %1550 = vmatprep.subr.bf16.mxu0 0
        %1551 = vmatpush1.bf16.msra.mxu0 0
        %1552 = vmatprep.subr.bf16.mxu0 0
        %1553 = vmatpush1.bf16.msra.mxu0 0
        %1554 = vmatprep.subr.bf16.mxu0 0
        %1555 = vmatpush1.bf16.msra.mxu0 %v1540
        %1556 = vmatprep.subr.bf16.mxu0 0
        %1557 = vmatpush1.bf16.msra.mxu0 %v1529
        %1558 = vmatprep.subr.bf16.mxu0 0
        %1559 = vmatpush2.bf16.msra.mxu0 0
        %1560 = vmatprep.subr.bf16.mxu0 0
        %1561 = vmatpush2.bf16.msra.mxu0 0
        %1562 = vmatprep.subr.bf16.mxu0 0
        %1563 = vmatpush2.bf16.msra.mxu0 0
        %1564 = vmatprep.subr.bf16.mxu0 0
        %1565 = vmatpush2.bf16.msra.mxu0 0
        %1566 = vmatprep.subr.bf16.mxu0 0
        %1567 = vmatpush2.bf16.msra.mxu0 0
        %1568 = vmatprep.subr.bf16.mxu0 0
        %1569 = vmatpush2.bf16.msra.mxu0 0
        %1570 = vmatprep.subr.bf16.mxu0 0
        %1571 = vmatpush2.bf16.msra.mxu0 0
        %1572 = vmatprep.subr.bf16.mxu0 0
        %1573 = vmatpush2.bf16.msra.mxu0 0
        %1574 = vmatprep.mubr.bf16.mxu0 0
        %1575 = vmatmul.mubr.bf16.gmra.mxu0 %v1534
        %v1576 = vpop.f32.mrf.mxu0
        %v1577 = vadd.f32 0.0, %v1576
        %v1578 = vpop.f32.mrf.mxu0
        %v1579 = vpop.f32.mrf.mxu0
        %v1580 = vadd.f32 0.0, %v1579
        %v1581 = vpop.f32.mrf.mxu0
        %1582 = vmatprep.mubr.bf16.mxu0 0
        %1583 = vmatmul.mubr.bf16.gmra.mxu0 %v1537
        %v1584 = vpop.f32.mrf.mxu0
        %v1585 = vadd.f32 0.0, %v1584
        %v1586 = vpop.f32.mrf.mxu0
        %v1587 = vpop.f32.mrf.mxu0
        %v1588 = vpop.f32.mrf.mxu0
        %1589 = vdwg.mxu0
        %1590 = vrot.lane.b32.xlu0 %v992, 64
        %v1591 = vpop.permute.xlu0 %1590
        %1592 = vrot.lane.b32.xlu0 %v993, 64
        %v1593 = vpop.permute.xlu0 %1592
        %v1596 = vsel %vm1262, %v1401, 0
        %v1599 = vsel %vm1262, %v1402, 0
        %v1602 = vsel %vm1414, %v1593, 0
        %1604 = vmatprep.subr.bf16.mxu0 0
        %1605 = vmatpush1.bf16.msra.mxu0 0
        %1606 = vmatprep.subr.bf16.mxu0 0
        %1607 = vmatpush1.bf16.msra.mxu0 0
        %1608 = vmatprep.subr.bf16.mxu0 0
        %1609 = vmatpush1.bf16.msra.mxu0 0
        %1610 = vmatprep.subr.bf16.mxu0 0
        %1611 = vmatpush1.bf16.msra.mxu0 0
        %1612 = vmatprep.subr.bf16.mxu0 0
        %1613 = vmatpush1.bf16.msra.mxu0 0
        %1614 = vmatprep.subr.bf16.mxu0 0
        %1615 = vmatpush1.bf16.msra.mxu0 0
        %1616 = vmatprep.subr.bf16.mxu0 0
        %1617 = vmatpush1.bf16.msra.mxu0 %v1602
        %1618 = vmatprep.subr.bf16.mxu0 0
        %1619 = vmatpush1.bf16.msra.mxu0 %v1591
        %1620 = vmatprep.subr.bf16.mxu0 0
        %1621 = vmatpush2.bf16.msra.mxu0 0
        %1622 = vmatprep.subr.bf16.mxu0 0
        %1623 = vmatpush2.bf16.msra.mxu0 0
        %1624 = vmatprep.subr.bf16.mxu0 0
        %1625 = vmatpush2.bf16.msra.mxu0 0
        %1626 = vmatprep.subr.bf16.mxu0 0
        %1627 = vmatpush2.bf16.msra.mxu0 0
        %1628 = vmatprep.subr.bf16.mxu0 0
        %1629 = vmatpush2.bf16.msra.mxu0 0
        %1630 = vmatprep.subr.bf16.mxu0 0
        %1631 = vmatpush2.bf16.msra.mxu0 0
        %1632 = vmatprep.subr.bf16.mxu0 0
        %1633 = vmatpush2.bf16.msra.mxu0 0
        %1634 = vmatprep.subr.bf16.mxu0 0
        %1635 = vmatpush2.bf16.msra.mxu0 0
        %1636 = vmatprep.mubr.bf16.mxu0 0
        %1637 = vmatmul.mubr.bf16.gmra.mxu0 %v1596
        %v1638 = vpop.f32.mrf.mxu0
        %v1639 = vadd.f32 0.0, %v1638
        %v1640 = vpop.f32.mrf.mxu0
        %v1641 = vpop.f32.mrf.mxu0
        %v1642 = vadd.f32 0.0, %v1641
        %v1643 = vpop.f32.mrf.mxu0
        %1644 = vmatprep.mubr.bf16.mxu0 0
        %1645 = vmatmul.mubr.bf16.gmra.mxu0 %v1599
        %v1646 = vpop.f32.mrf.mxu0
        %v1647 = vadd.f32 0.0, %v1646
        %v1648 = vpop.f32.mrf.mxu0
        %v1649 = vpop.f32.mrf.mxu0
        %v1650 = vpop.f32.mrf.mxu0
        %1651 = vdwg.mxu0
        %1655 = vrot.lane.b32.xlu0 %v1515, 8
        %v1656 = vpop.permute.xlu0 %1655
        %1657 = vrot.lane.b32.xlu0 %v1518, 8
        %v1658 = vpop.permute.xlu0 %1657
        %1659 = vrot.lane.b32.xlu0 %v1523, 8
        %v1660 = vpop.permute.xlu0 %1659
        %1667 = vrot.lane.b32.xlu0 %v1577, 16
        %v1668 = vpop.permute.xlu0 %1667
        %1669 = vrot.lane.b32.xlu0 %v1580, 16
        %v1670 = vpop.permute.xlu0 %1669
        %1671 = vrot.lane.b32.xlu0 %v1585, 16
        %v1672 = vpop.permute.xlu0 %1671
        %1679 = vrot.lane.b32.xlu0 %v1639, 24
        %v1680 = vpop.permute.xlu0 %1679
        %1681 = vrot.lane.b32.xlu0 %v1642, 24
        %v1682 = vpop.permute.xlu0 %1681
        %1683 = vrot.lane.b32.xlu0 %v1647, 24
        %v1684 = vpop.permute.xlu0 %1683
        %v1688 = vsel %vm1003, %v1453, %v1656
        %v1689 = vsel %vm1003, %v1456, %v1658
        %v1690 = vsel %vm1003, %v1461, %v1660
        %vm1691 = vcmask 130048
        %v1692 = vsel %vm1691, %v1688, %v1668
        %v1693 = vsel %vm1691, %v1689, %v1670
        %v1694 = vsel %vm1691, %v1690, %v1672
        %v1695 = vsel %vm1262, %v1692, %v1680
        %v1696 = vsel %vm1262, %v1693, %v1682
        %v1697 = vsel %vm1262, %v1694, %v1684
        %v1698 = vld [vmem:[%s734] sm:$0xf]
        %v1699 = vld [vmem:[%s734 + $0x4] sm:$0xf]
        %v1700 = vld [vmem:[%s734 + $0x8] sm:$0xf]
        %v1701 = vld [vmem:[%s734 + $0xc] sm:$0xf]
        %v1702 = vld [vmem:[%s737] sm:$0x1]
        %v1703 = vpack.c.bf16 %v1696, %v1695
        %v1704 = vpack.c.bf16 %v1697, %v1697
        %v1709 = vunpack.c.l.b16 %v1698
        %v1710 = vunpack.c.l.b16 %v1699
        %v1711 = vunpack.c.l.b16 %v1700
        %v1712 = vunpack.c.l.b16 %v1701
        %v1713 = vpack.c.b16 %v1710, %v1709
        %v1714 = vpack.c.b16 %v1712, %v1711
        %v1718 = vsel %vm777, %v1703, 0
        %v1721 = vsel %vm777, %v1704, 0
        %1723 = vmatprep.subr.bf16.mxu0 0
        %1724 = vmatpush1.bf16.msra.mxu0 0
        %1725 = vmatprep.subr.bf16.mxu0 0
        %1726 = vmatpush1.bf16.msra.mxu0 0
        %1727 = vmatprep.subr.bf16.mxu0 0
        %1728 = vmatpush1.bf16.msra.mxu0 0
        %1729 = vmatprep.subr.bf16.mxu0 0
        %1730 = vmatpush1.bf16.msra.mxu0 0
        %1731 = vmatprep.subr.bf16.mxu0 0
        %1732 = vmatpush1.bf16.msra.mxu0 0
        %1733 = vmatprep.subr.bf16.mxu0 0
        %1734 = vmatpush1.bf16.msra.mxu0 0
        %1735 = vmatprep.subr.bf16.mxu0 0
        %1736 = vmatpush1.bf16.msra.mxu0 %v1714
        %1737 = vmatprep.subr.bf16.mxu0 0
        %1738 = vmatpush1.bf16.msra.mxu0 %v1713
        %1739 = vmatprep.subr.bf16.mxu0 0
        %1740 = vmatpush2.bf16.msra.mxu0 0
        %1741 = vmatprep.subr.bf16.mxu0 0
        %1742 = vmatpush2.bf16.msra.mxu0 0
        %1743 = vmatprep.subr.bf16.mxu0 0
        %1744 = vmatpush2.bf16.msra.mxu0 0
        %1745 = vmatprep.subr.bf16.mxu0 0
        %1746 = vmatpush2.bf16.msra.mxu0 0
        %1747 = vmatprep.subr.bf16.mxu0 0
        %1748 = vmatpush2.bf16.msra.mxu0 0
        %1749 = vmatprep.subr.bf16.mxu0 0
        %1750 = vmatpush2.bf16.msra.mxu0 0
        %1751 = vmatprep.subr.bf16.mxu0 0
        %1752 = vmatpush2.bf16.msra.mxu0 0
        %1753 = vmatprep.subr.bf16.mxu0 0
        %1754 = vmatpush2.bf16.msra.mxu0 0
        %1755 = vmatprep.mubr.bf16.mxu0 0
        %1756 = vmatmul.mubr.bf16.gmra.mxu0 %v1718
        %v1757 = vpop.f32.mrf.mxu0
        %v1758 = vadd.f32 0.0, %v1757
        %v1759 = vpop.f32.mrf.mxu0
        %v1760 = vpop.f32.mrf.mxu0
        %v1761 = vadd.f32 0.0, %v1760
        %v1762 = vpop.f32.mrf.mxu0
        %1763 = vmatprep.mubr.bf16.mxu0 0
        %1764 = vmatmul.mubr.bf16.gmra.mxu0 %v1721
        %v1765 = vpop.f32.mrf.mxu0
        %v1766 = vadd.f32 0.0, %v1765
        %v1767 = vpop.f32.mrf.mxu0
        %v1768 = vpop.f32.mrf.mxu0
        %v1769 = vpop.f32.mrf.mxu0
        %1770 = vdwg.mxu0
        %v1771 = vadd.f32 %v772, %v1758
        %v1772 = vadd.f32 %v773, %v1761
        %v1773 = vadd.f32 %v774, %v1766
        %v1775 = vlaneseq
        %v1776 = vshrl.u32 %v1775, 7
        %v1777 = vsub.s32 0, %v1776
        %v1778 = vrot.slane %v1702, %v1777
        %v1780 = vadd.f32 %v1771, %v1778
        %v1781 = vadd.f32 %v1772, %v1778
        %v1782 = vadd.f32 %v1773, %v1778
        %v1783 = vld [vmem:[%s740] sm:$0x1]
        %v1784 = vld [vmem:[%s743] sm:$0x1]
        %v1785 = vsel %vm777, %v1780, 0.0
        %1786 = vadd.xlane.f32.xlu0 %v1785
        %v1787 = vpop.xlane.xlu0 %1786
        %v1788 = vsel %vm777, %v1781, 0.0
        %1789 = vadd.xlane.f32.xlu0 %v1788
        %v1790 = vpop.xlane.xlu0 %1789
        %v1791 = vsel %vm777, %v1782, 0.0
        %1792 = vadd.xlane.f32.xlu0 %v1791
        %v1793 = vpop.xlane.xlu0 %1792
        %v1794 = vmul.f32 %v1787, %v787
        %v1795 = vmul.f32 %v1790, %v787
        %v1796 = vmul.f32 %v1793, %v787
        %v1797 = vsub.f32 %v1780, %v1794
        %v1798 = vsub.f32 %v1781, %v1795
        %v1799 = vsub.f32 %v1782, %v1796
        %v1800 = vmul.f32 %v1797, %v1797
        %v1801 = vmul.f32 %v1798, %v1798
        %v1802 = vmul.f32 %v1799, %v1799
        %v1803 = vsel %vm777, %v1800, 0.0
        %1804 = vadd.xlane.f32.xlu0 %v1803
        %v1805 = vpop.xlane.xlu0 %1804
        %v1806 = vsel %vm777, %v1801, 0.0
        %1807 = vadd.xlane.f32.xlu0 %v1806
        %v1808 = vpop.xlane.xlu0 %1807
        %v1809 = vsel %vm777, %v1802, 0.0
        %1810 = vadd.xlane.f32.xlu0 %v1809
        %v1811 = vpop.xlane.xlu0 %1810
        %v1812 = vmul.f32 %v1805, %v787
        %v1813 = vmul.f32 %v1808, %v787
        %v1814 = vmul.f32 %v1811, %v787
        %v1815 = vadd.f32 %v1812, 1e-05
        %v1816 = vadd.f32 %v1813, 1e-05
        %v1817 = vadd.f32 %v1814, 1e-05
        %v1818 = vrsqrt.pop %v1815
        %v1819 = vrsqrt.pop %v1816
        %v1820 = vrsqrt.pop %v1817
        %v1821 = vmul.f32 %v1797, %v1818
        %v1822 = vmul.f32 %v1798, %v1819
        %v1823 = vmul.f32 %v1799, %v1820
        %v1825 = vlaneseq
        %v1826 = vshrl.u32 %v1825, 7
        %v1827 = vsub.s32 0, %v1826
        %v1828 = vrot.slane %v1783, %v1827
        %v1830 = vmul.f32 %v1821, %v1828
        %v1831 = vmul.f32 %v1822, %v1828
        %v1832 = vmul.f32 %v1823, %v1828
        %v1834 = vlaneseq
        %v1835 = vshrl.u32 %v1834, 7
        %v1836 = vsub.s32 0, %v1835
        %v1837 = vrot.slane %v1784, %v1836
        %v1839 = vadd.f32 %v1830, %v1837
        %v1840 = vadd.f32 %v1831, %v1837
        %v1841 = vadd.f32 %v1832, %v1837
        %v1842 = vld [vmem:[%s748] sm:$0xf]
        %v1843 = vld [vmem:[%s748 + $0x4] sm:$0xf]
        %v1844 = vld [vmem:[%s748 + $0x8] sm:$0xf]
        %v1845 = vld [vmem:[%s748 + $0xc] sm:$0xf]
        %v1846 = vld [vmem:[%s751] sm:$0x1]
        %v1847 = vpack.c.bf16 %v1840, %v1839
        %v1848 = vpack.c.bf16 %v1841, %v1841
        %v1850 = vlaneseq
        %v1851 = vshrl.u32 %v1850, 7
        %v1852 = vsub.s32 0, %v1851
        %v1853 = vrot.slane %v1846, %v1852
        %v1859 = vunpack.c.l.b16 %v1842
        %v1860 = vunpack.c.l.b16 %v1843
        %v1861 = vunpack.c.l.b16 %v1844
        %v1862 = vunpack.c.l.b16 %v1845
        %v1863 = vpack.c.b16 %v1860, %v1859
        %v1864 = vpack.c.b16 %v1862, %v1861
        %v1868 = vsel %vm777, %v1847, 0
        %v1871 = vsel %vm777, %v1848, 0
        %1873 = vmatprep.subr.bf16.mxu0 0
        %1874 = vmatpush1.bf16.msra.mxu0 0
        %1875 = vmatprep.subr.bf16.mxu0 0
        %1876 = vmatpush1.bf16.msra.mxu0 0
        %1877 = vmatprep.subr.bf16.mxu0 0
        %1878 = vmatpush1.bf16.msra.mxu0 0
        %1879 = vmatprep.subr.bf16.mxu0 0
        %1880 = vmatpush1.bf16.msra.mxu0 0
        %1881 = vmatprep.subr.bf16.mxu0 0
        %1882 = vmatpush1.bf16.msra.mxu0 0
        %1883 = vmatprep.subr.bf16.mxu0 0
        %1884 = vmatpush1.bf16.msra.mxu0 0
        %1885 = vmatprep.subr.bf16.mxu0 0
        %1886 = vmatpush1.bf16.msra.mxu0 %v1864
        %1887 = vmatprep.subr.bf16.mxu0 0
        %1888 = vmatpush1.bf16.msra.mxu0 %v1863
        %1889 = vmatprep.subr.bf16.mxu0 0
        %1890 = vmatpush2.bf16.msra.mxu0 0
        %1891 = vmatprep.subr.bf16.mxu0 0
        %1892 = vmatpush2.bf16.msra.mxu0 0
        %1893 = vmatprep.subr.bf16.mxu0 0
        %1894 = vmatpush2.bf16.msra.mxu0 0
        %1895 = vmatprep.subr.bf16.mxu0 0
        %1896 = vmatpush2.bf16.msra.mxu0 0
        %1897 = vmatprep.subr.bf16.mxu0 0
        %1898 = vmatpush2.bf16.msra.mxu0 0
        %1899 = vmatprep.subr.bf16.mxu0 0
        %1900 = vmatpush2.bf16.msra.mxu0 0
        %1901 = vmatprep.subr.bf16.mxu0 0
        %1902 = vmatpush2.bf16.msra.mxu0 0
        %1903 = vmatprep.subr.bf16.mxu0 0
        %1904 = vmatpush2.bf16.msra.mxu0 0
        %1905 = vmatprep.mubr.bf16.mxu0 0
        %1906 = vmatmul.mubr.bf16.gmra.mxu0 %v1868
        %v1907 = vpop.f32.mrf.mxu0
        %v1908 = vadd.f32 %v1853, %v1907
        %v1909 = vpop.f32.mrf.mxu0
        %v1910 = vpop.f32.mrf.mxu0
        %v1911 = vadd.f32 %v1853, %v1910
        %v1912 = vpop.f32.mrf.mxu0
        %1913 = vmatprep.mubr.bf16.mxu0 0
        %1914 = vmatmul.mubr.bf16.gmra.mxu0 %v1871
        %v1915 = vpop.f32.mrf.mxu0
        %v1916 = vadd.f32 %v1853, %v1915
        %v1917 = vpop.f32.mrf.mxu0
        %v1918 = vpop.f32.mrf.mxu0
        %v1919 = vpop.f32.mrf.mxu0
        %1920 = vdwg.mxu0
        %v1921 = vmul.f32 %v1908, 1.702
        %v1922 = vmul.f32 %v1911, 1.702
        %v1923 = vmul.f32 %v1916, 1.702
        %v1924 = vxor.u32 %v1921, 2147483648
        %v1925 = vxor.u32 %v1922, 2147483648
        %v1926 = vxor.u32 %v1923, 2147483648
        %v1927 = vmul.f32 %v1924, 1.442695
        %v1928 = vpow.pop %v1927
        %v1929 = vmul.f32 %v1925, 1.442695
        %v1930 = vpow.pop %v1929
        %v1931 = vmul.f32 %v1926, 1.442695
        %v1932 = vpow.pop %v1931
        %v1933 = vadd.f32 %v1928, 1.0
        %v1934 = vadd.f32 %v1930, 1.0
        %v1935 = vadd.f32 %v1932, 1.0
        %v1936 = vrcp.pop %v1933
        %v1937 = vmul.f32 1.0, %v1936
        %v1938 = vrcp.pop %v1934
        %v1939 = vmul.f32 1.0, %v1938
        %v1940 = vrcp.pop %v1935
        %v1941 = vmul.f32 1.0, %v1940
        %v1942 = vmul.f32 %v1908, %v1937
        %v1943 = vmul.f32 %v1911, %v1939
        %v1944 = vmul.f32 %v1916, %v1941
        %v1945 = vld [vmem:[%s756] sm:$0xf]
        %v1946 = vld [vmem:[%s756 + $0x4] sm:$0xf]
        %v1947 = vld [vmem:[%s756 + $0x8] sm:$0xf]
        %v1948 = vld [vmem:[%s756 + $0xc] sm:$0xf]
        %v1949 = vld [vmem:[%s756 + $0x10] sm:$0xf]
        %v1950 = vld [vmem:[%s756 + $0x14] sm:$0xf]
        %v1951 = vld [vmem:[%s756 + $0x18] sm:$0xf]
        %v1952 = vld [vmem:[%s756 + $0x1c] sm:$0xf]
        %v1953 = vld [vmem:[%s756 + $0x20] sm:$0xf]
        %v1954 = vld [vmem:[%s756 + $0x24] sm:$0xf]
        %v1955 = vld [vmem:[%s756 + $0x28] sm:$0xf]
        %v1956 = vld [vmem:[%s756 + $0x2c] sm:$0xf]
        %v1957 = vld [vmem:[%s756 + $0x30] sm:$0xf]
        %v1958 = vld [vmem:[%s756 + $0x34] sm:$0xf]
        %v1959 = vld [vmem:[%s756 + $0x38] sm:$0xf]
        %v1960 = vld [vmem:[%s756 + $0x3c] sm:$0xf]
        %v1961 = vld [vmem:[%s759] sm:$0x1]
        %v1962 = vpack.c.bf16 %v1943, %v1942
        %v1963 = vpack.c.bf16 %v1944, %v1944
        %v1980 = vunpack.c.l.b16 %v1945
        %v1981 = vunpack.c.l.b16 %v1946
        %v1982 = vunpack.c.l.b16 %v1947
        %v1983 = vunpack.c.l.b16 %v1948
        %v1984 = vunpack.c.l.b16 %v1949
        %v1985 = vunpack.c.l.b16 %v1950
        %v1986 = vunpack.c.l.b16 %v1951
        %v1987 = vunpack.c.l.b16 %v1952
        %v1988 = vunpack.c.l.b16 %v1953
        %v1989 = vunpack.c.l.b16 %v1954
        %v1990 = vunpack.c.l.b16 %v1955
        %v1991 = vunpack.c.l.b16 %v1956
        %v1992 = vunpack.c.l.b16 %v1957
        %v1993 = vunpack.c.l.b16 %v1958
        %v1994 = vunpack.c.l.b16 %v1959
        %v1995 = vunpack.c.l.b16 %v1960
        %v1996 = vpack.c.b16 %v1981, %v1980
        %v1997 = vpack.c.b16 %v1983, %v1982
        %v1998 = vpack.c.b16 %v1985, %v1984
        %v1999 = vpack.c.b16 %v1987, %v1986
        %v2000 = vpack.c.b16 %v1989, %v1988
        %v2001 = vpack.c.b16 %v1991, %v1990
        %v2002 = vpack.c.b16 %v1993, %v1992
        %v2003 = vpack.c.b16 %v1995, %v1994
        %2012 = vmatprep.subr.bf16.mxu0 0
        %2013 = vmatpush1.bf16.msra.mxu0 %v2003
        %2014 = vmatprep.subr.bf16.mxu0 0
        %2015 = vmatpush1.bf16.msra.mxu0 %v2002
        %2016 = vmatprep.subr.bf16.mxu0 0
        %2017 = vmatpush1.bf16.msra.mxu0 %v2001
        %2018 = vmatprep.subr.bf16.mxu0 0
        %2019 = vmatpush1.bf16.msra.mxu0 %v2000
        %2020 = vmatprep.subr.bf16.mxu0 0
        %2021 = vmatpush1.bf16.msra.mxu0 %v1999
        %2022 = vmatprep.subr.bf16.mxu0 0
        %2023 = vmatpush1.bf16.msra.mxu0 %v1998
        %2024 = vmatprep.subr.bf16.mxu0 0
        %2025 = vmatpush1.bf16.msra.mxu0 %v1997
        %2026 = vmatprep.subr.bf16.mxu0 0
        %2027 = vmatpush1.bf16.msra.mxu0 %v1996
        %2028 = vmatprep.subr.bf16.mxu0 0
        %2029 = vmatpush2.bf16.msra.mxu0 0
        %2030 = vmatprep.subr.bf16.mxu0 0
        %2031 = vmatpush2.bf16.msra.mxu0 0
        %2032 = vmatprep.subr.bf16.mxu0 0
        %2033 = vmatpush2.bf16.msra.mxu0 0
        %2034 = vmatprep.subr.bf16.mxu0 0
        %2035 = vmatpush2.bf16.msra.mxu0 0
        %2036 = vmatprep.subr.bf16.mxu0 0
        %2037 = vmatpush2.bf16.msra.mxu0 0
        %2038 = vmatprep.subr.bf16.mxu0 0
        %2039 = vmatpush2.bf16.msra.mxu0 0
        %2040 = vmatprep.subr.bf16.mxu0 0
        %2041 = vmatpush2.bf16.msra.mxu0 0
        %2042 = vmatprep.subr.bf16.mxu0 0
        %2043 = vmatpush2.bf16.msra.mxu0 0
        %2044 = vmatprep.mubr.bf16.mxu0 0
        %2045 = vmatmul.mubr.bf16.gmra.mxu0 %v1962
        %v2046 = vpop.f32.mrf.mxu0
        %v2047 = vadd.f32 0.0, %v2046
        %v2048 = vpop.f32.mrf.mxu0
        %v2049 = vpop.f32.mrf.mxu0
        %v2050 = vadd.f32 0.0, %v2049
        %v2051 = vpop.f32.mrf.mxu0
        %2052 = vmatprep.mubr.bf16.mxu0 0
        %2053 = vmatmul.mubr.bf16.gmra.mxu0 %v1963
        %v2054 = vpop.f32.mrf.mxu0
        %v2055 = vadd.f32 0.0, %v2054
        %v2056 = vpop.f32.mrf.mxu0
        %v2057 = vpop.f32.mrf.mxu0
        %v2058 = vpop.f32.mrf.mxu0
        %2059 = vdwg.mxu0
        %v2060 = vadd.f32 %v1780, %v2047
        %v2061 = vadd.f32 %v1781, %v2050
        %v2062 = vadd.f32 %v1782, %v2055
        %v2064 = vlaneseq
        %v2065 = vshrl.u32 %v2064, 7
        %v2066 = vsub.s32 0, %v2065
        %v2067 = vrot.slane %v1961, %v2066
        %v2069 = vadd.f32 %v2060, %v2067
        %v2070 = vadd.f32 %v2061, %v2067
        %v2071 = vadd.f32 %v2062, %v2067
        %2072 = vst.msk [vmem:[#allocation2] sm:$0xff] %vm777, %v2069
        %2073 = vst.msk [vmem:[#allocation2 + $0x8] sm:$0xff] %vm777, %v2070
        %2074 = vst.msk [vmem:[#allocation2 + $0x10] sm:$0xff] %vm777, %v2071
        %p2075 = scmp.eq.s32.totalorder %s32, 1
        // Predicated region
        $region105: #{tpu_custom_call.1} parent=91 // pred_check
          %p2076 = pneg %p2075
        $region106: #{tpu_custom_call.1} parent=91 // pred_check_branch
          %2078 = sbr.rel (%p2076) target = $region108
        $region107: #{tpu_custom_call.1} parent=91 // pred_region
          %v2079 = vld [vmem:[%s2] sm:$0x3]
          %v2081 = vsel %vm1262, %v2079, 0
          %2083 = vmatprep.subr.mxu0 0.0
          %2084 = vmatpush1.msra.mxu0 0.0
          %2085 = vmatprep.subr.mxu0 0.0
          %2086 = vmatpush1.msra.mxu0 0.0
          %2087 = vmatprep.subr.mxu0 0.0
          %2088 = vmatpush1.msra.mxu0 0.0
          %2089 = vmatprep.subr.mxu0 0.0
          %2090 = vmatpush1.msra.mxu0 0.0
          %2091 = vmatprep.subr.mxu0 0.0
          %2092 = vmatpush1.msra.mxu0 0.0
          %2093 = vmatprep.subr.mxu0 0.0
          %2094 = vmatpush1.msra.mxu0 0.0
          %2095 = vmatprep.subr.mxu0 0.0
          %2096 = vmatpush1.msra.mxu0 0.0
          %2097 = vmatprep.subr.mxu0 0.0
          %2098 = vmatpush1.msra.mxu0 0.0
          %2099 = vmatprep.subr.mxu0 0.0
          %2100 = vmatpush1.msra.mxu0 0.0
          %2101 = vmatprep.subr.mxu0 0.0
          %2102 = vmatpush1.msra.mxu0 0.0
          %2103 = vmatprep.subr.mxu0 0.0
          %2104 = vmatpush1.msra.mxu0 0.0
          %2105 = vmatprep.subr.mxu0 0.0
          %2106 = vmatpush1.msra.mxu0 0.0
          %2107 = vmatprep.subr.mxu0 0.0
          %2108 = vmatpush1.msra.mxu0 0.0
          %2109 = vmatprep.subr.mxu0 0.0
          %2110 = vmatpush1.msra.mxu0 %v2071
          %2111 = vmatprep.subr.mxu0 0.0
          %2112 = vmatpush1.msra.mxu0 %v2070
          %2113 = vmatprep.subr.mxu0 0.0
          %2114 = vmatpush1.msra.mxu0 %v2069
          %2115 = vmatprep.subr.mxu0 0.0
          %2116 = vmatpush2.msra.mxu0 0.0
          %2117 = vmatprep.subr.mxu0 0.0
          %2118 = vmatpush2.msra.mxu0 0.0
          %2119 = vmatprep.subr.mxu0 0.0
          %2120 = vmatpush2.msra.mxu0 0.0
          %2121 = vmatprep.subr.mxu0 0.0
          %2122 = vmatpush2.msra.mxu0 0.0
          %2123 = vmatprep.subr.mxu0 0.0
          %2124 = vmatpush2.msra.mxu0 0.0
          %2125 = vmatprep.subr.mxu0 0.0
          %2126 = vmatpush2.msra.mxu0 0.0
          %2127 = vmatprep.subr.mxu0 0.0
          %2128 = vmatpush2.msra.mxu0 0.0
          %2129 = vmatprep.subr.mxu0 0.0
          %2130 = vmatpush2.msra.mxu0 0.0
          %2131 = vmatprep.subr.mxu0 0.0
          %2132 = vmatpush2.msra.mxu0 0.0
          %2133 = vmatprep.subr.mxu0 0.0
          %2134 = vmatpush2.msra.mxu0 0.0
          %2135 = vmatprep.subr.mxu0 0.0
          %2136 = vmatpush2.msra.mxu0 0.0
          %2137 = vmatprep.subr.mxu0 0.0
          %2138 = vmatpush2.msra.mxu0 0.0
          %2139 = vmatprep.subr.mxu0 0.0
          %2140 = vmatpush2.msra.mxu0 0.0
          %2141 = vmatprep.subr.mxu0 0.0
          %2142 = vmatpush2.msra.mxu0 0.0
          %2143 = vmatprep.subr.mxu0 0.0
          %2144 = vmatpush2.msra.mxu0 0.0
          %2145 = vmatprep.subr.mxu0 0.0
          %2146 = vmatpush2.msra.mxu0 0.0
          %2147 = vmatprep.mubr.f32.mxu0 0.0
          %2148 = vmatmul.mubr.f32.gmra.mxu0 %v2081
          %v2149 = vpop.f32.mrf.mxu0
          %v2150 = vadd.f32 0.0, %v2149
          %v2151 = vpop.f32.mrf.mxu0
          %2152 = vdwg.mxu0
          %v2153 = vld [vmem:[#allocation3] sm:$0x1]
          %v2154 = vld [vmem:[#allocation6] sm:$0x1]
          %vm2155 = vcmask 254976
          %v2156 = vsel %vm2155, %v2150, 0.0
          %2157 = vadd.xlane.f32.xlu0 %v2156
          %v2158 = vpop.xlane.xlu0 %2157
          %v2159 = vmul.f32 %v2158, %v787
          %v2160 = vsub.f32 %v2150, %v2159
          %v2161 = vmul.f32 %v2160, %v2160
          %v2162 = vsel %vm2155, %v2161, 0.0
          %2163 = vadd.xlane.f32.xlu0 %v2162
          %v2164 = vpop.xlane.xlu0 %2163
          %v2165 = vmul.f32 %v2164, %v787
          %v2166 = vadd.f32 %v2165, 1e-05
          %v2167 = vrsqrt.pop %v2166
          %v2168 = vmul.f32 %v2160, %v2167
          %v2170 = vlaneseq
          %v2171 = vshrl.u32 %v2170, 7
          %v2172 = vsub.s32 0, %v2171
          %v2173 = vrot.slane %v2153, %v2172
          %v2175 = vmul.f32 %v2168, %v2173
          %v2177 = vlaneseq
          %v2178 = vshrl.u32 %v2177, 7
          %v2179 = vsub.s32 0, %v2178
          %v2180 = vrot.slane %v2154, %v2179
          %v2182 = vadd.f32 %v2175, %v2180
          %v2183 = vld [vmem:[%s5] sm:$0xf]
          %v2184 = vld [vmem:[%s5 + $0x4] sm:$0xf]
          %v2185 = vld [vmem:[%s5 + $0x8] sm:$0xf]
          %v2186 = vld [vmem:[%s5 + $0xc] sm:$0xf]
          %v2187 = vpack.c.bf16 %v2182, %v2182
          %v2192 = vunpack.c.l.b16 %v2183
          %v2193 = vunpack.c.l.b16 %v2184
          %v2194 = vunpack.c.l.b16 %v2185
          %v2195 = vunpack.c.l.b16 %v2186
          %v2196 = vpack.c.b16 %v2193, %v2192
          %v2197 = vpack.c.b16 %v2195, %v2194
          %v2201 = vsel %vm777, %v2187, 0
          %2203 = vmatprep.subr.bf16.mxu0 0
          %2204 = vmatpush1.bf16.msra.mxu0 0
          %2205 = vmatprep.subr.bf16.mxu0 0
          %2206 = vmatpush1.bf16.msra.mxu0 0
          %2207 = vmatprep.subr.bf16.mxu0 0
          %2208 = vmatpush1.bf16.msra.mxu0 0
          %2209 = vmatprep.subr.bf16.mxu0 0
          %2210 = vmatpush1.bf16.msra.mxu0 0
          %2211 = vmatprep.subr.bf16.mxu0 0
          %2212 = vmatpush1.bf16.msra.mxu0 0
          %2213 = vmatprep.subr.bf16.mxu0 0
          %2214 = vmatpush1.bf16.msra.mxu0 0
          %2215 = vmatprep.subr.bf16.mxu0 0
          %2216 = vmatpush1.bf16.msra.mxu0 %v2197
          %2217 = vmatprep.subr.bf16.mxu0 0
          %2218 = vmatpush1.bf16.msra.mxu0 %v2196
          %2219 = vmatprep.subr.bf16.mxu0 0
          %2220 = vmatpush2.bf16.msra.mxu0 0
          %2221 = vmatprep.subr.bf16.mxu0 0
          %2222 = vmatpush2.bf16.msra.mxu0 0
          %2223 = vmatprep.subr.bf16.mxu0 0
          %2224 = vmatpush2.bf16.msra.mxu0 0
          %2225 = vmatprep.subr.bf16.mxu0 0
          %2226 = vmatpush2.bf16.msra.mxu0 0
          %2227 = vmatprep.subr.bf16.mxu0 0
          %2228 = vmatpush2.bf16.msra.mxu0 0
          %2229 = vmatprep.subr.bf16.mxu0 0
          %2230 = vmatpush2.bf16.msra.mxu0 0
          %2231 = vmatprep.subr.bf16.mxu0 0
          %2232 = vmatpush2.bf16.msra.mxu0 0
          %2233 = vmatprep.subr.bf16.mxu0 0
          %2234 = vmatpush2.bf16.msra.mxu0 0
          %2235 = vmatprep.mubr.bf16.mxu0 0
          %2236 = vmatmul.mubr.bf16.gmra.mxu0 %v2201
          %v2237 = vpop.f32.mrf.mxu0
          %v2238 = vadd.f32 0.0, %v2237
          %v2239 = vpop.f32.mrf.mxu0
          %v2240 = vpop.f32.mrf.mxu0
          %v2241 = vpop.f32.mrf.mxu0
          %2242 = vdwg.mxu0
          %2243 = vst.msk [vmem:[#allocation8] sm:$0x3] %vm2155, %v2238
        $region108: #{tpu_custom_call.1} parent=91 // pred_fallthru
          _
        // Predicated region
        $region109: #{tpu_custom_call.1} parent=91 // pred_check
          %p2244 = pneg %p483
        $region110: #{tpu_custom_call.1} parent=91 // pred_check_branch
          %2246 = sbr.rel (%p2244) target = $region112
        $region111: #{tpu_custom_call.1} parent=91 // pred_region
          %s2248 = ssub.s32 32, 32
          %2249 = vsyncadd [#allocation5], %s2248
          %s2251 = sshll.u32 [#allocation8], 4
          %s2252 = int_to_ptr.vmem [resolvable:$true] %s2251
          %2254 = dma.vmem_to_hbm [thread:$0]  %s2252, 32, %s18, [#allocation5]
        $region112: #{tpu_custom_call.1} parent=91 // pred_fallthru
          _
        // Predicated region
        $region113: #{tpu_custom_call.1} parent=91 // pred_check
          %p2255 = pneg %p483
        $region114: #{tpu_custom_call.1} parent=91 // pred_check_branch
          %2257 = sbr.rel (%p2255) target = $region116
        $region115: #{tpu_custom_call.1} parent=91 // pred_region
          %2258 = dma.done [#allocation5], 32
        $region116: #{tpu_custom_call.1} parent=91 // pred_fallthru
          _
      $region92: #{tpu_custom_call.1} parent=5 // pred_fallthru
        _
      %p2259 = scmp.le.s32.totalorder 2, %s27
      // Predicated region
      $region117: #{tpu_custom_call.1} parent=5 // pred_check
        %p2260 = pneg %p2259
      $region118: #{tpu_custom_call.1} parent=5 // pred_check_branch
        %2262 = sbr.rel (%p2260) target = $region120
      $region119: #{tpu_custom_call.1} parent=5 // pred_region
        %s2263 = ssub.s32 %s27, 2
      $region120: #{tpu_custom_call.1} parent=5 // pred_fallthru
        _
    $region6: #{tpu_custom_call.1} parent=1 // loop_footer
      %s31 = sadd.s32 1, %s27
    $region7: #{tpu_custom_call.1} parent=1 // loop_footer_branch
      %26 = sbr.rel target = $region3
    $region8: #{tpu_custom_call.1} parent=1 // loop_exit
      _
    %2264 = vsyncpa [#allocation4], 1
    %s2265 = scalar_lea.sflag [#allocation4], 1
    %2266 = vsyncpa %s2265, 1
    %2267 = vsyncpa [#allocation7], 1
    %2268 = vsyncpa [#allocation5], 1
    %s2269 = scalar_lea.sflag [#allocation5], 1
    %2270 = vsyncpa %s2269, 1

</llo_original>
